<compile_context>
chip_gen: v7x
topology: tpu7x:2x2x1
jax: 0.10.0
libtpu: 0.0.40
codegen_flags: <defaults>
</compile_context>

<pallas_src>
import functools

import jax
import jax.numpy as jnp
from jax.experimental import pallas as pl
from jax.experimental.pallas import tpu as pltpu

_BN_EPS = 1e-5            # torch.nn.BatchNorm2d default (training-mode batch stats)
_PALLAS_MIN_ROWS = 256    # below this a pallas_call is pure launch latency


def _tpu_config():
    """(vmem_limit_bytes, max row tile) for the local TPU generation."""
    cap = 64 << 20                                   # conservative (v7x physical VMEM)
    try:
        info = pltpu.get_tpu_info()
        cap = int(getattr(info, "vmem_capacity_bytes", 0)) or cap
    except Exception:
        pass
    vmem_limit = min((cap * 3) // 4, 96 << 20)       # leave compiler headroom
    max_tm = 1024 if cap >= (100 << 20) else 512     # v5e/v6e: 128 MiB; v7x: 64 MiB
    return vmem_limit, max_tm


_VMEM_LIMIT, _MAX_TM = _tpu_config()


# ----------------------------- Pallas kernels ------------------------------

def _matmul_kernel(x_ref, w_ref, o_ref):
    o_ref[...] = jnp.dot(x_ref[...], w_ref[...],
                         preferred_element_type=jnp.float32).astype(o_ref.dtype)


def _bn_relu_matmul_kernel(x_ref, st_ref, w_ref, o_ref):
    # Prologue: previous layer's training-mode BN (precomputed affine) + ReLU
    # in f32, then bf16 MXU matmul with f32 accumulation.
    x = x_ref[...].astype(jnp.float32)
    xn = jnp.maximum(x * st_ref[0:1, :] + st_ref[1:2, :], 0.0)
    o_ref[...] = jnp.dot(xn.astype(w_ref.dtype), w_ref[...],
                         preferred_element_type=jnp.float32).astype(o_ref.dtype)


def _bias_tanh_kernel(x_ref, b_ref, o_ref):
    o_ref[...] = jnp.tanh(x_ref[...].astype(jnp.float32)
                          + b_ref[...]).astype(o_ref.dtype)


# ------------------------------ tiling helpers ------------------------------

def _round_up(v, m):
    return ((v + m - 1) // m) * m


def _pick_tm(m, max_tm):
    """Row tile: large for the HBM roofline, but always >=2 blocks along the
    'parallel' axis (when m allows) so both v7x TensorCores are used."""
    if m <= 8:
        return 8
    return min(max_tm, _round_up(pl.cdiv(m, 2), 8))


def _pick_tn(n):
    """Lane tile for the 16*C_out output dimension (keeps v7x VMEM in check)."""
    if n % 128 == 0:
        for tn in (512, 384, 256, 128):
            if n % tn == 0:
                return tn
    return n


def _pad_rows(x, tm):
    pad = (-x.shape[0]) % tm
    return jnp.pad(x, ((0, pad), (0, 0))) if pad else x


# ----------------------------- Pallas wrappers ------------------------------

def matmul_bn_relu(x2d, w_flat, *, scale=None, shift=None, out_dtype=jnp.bfloat16):
    """y = (relu(x*scale + shift) if scale is given else x) @ w_flat, row/lane tiled.

    K (= C_in) stays VMEM-resident (sub-pixel formulation keeps K small)."""
    m, k = x2d.shape
    n = w_flat.shape[1]

    if m < _PALLAS_MIN_ROWS:
        # Tiny-M layers: per-call + per-grid-step overhead dwarfs the work.
        xf = x2d.astype(jnp.float32)
        if scale is not None:
            xf = jnp.maximum(xf * scale + shift, 0.0)
        y = jnp.dot(xf.astype(jnp.bfloat16), w_flat,
                    preferred_element_type=jnp.float32)
        return y.astype(out_dtype)

    tm = _pick_tm(m, _MAX_TM)
    tn = _pick_tn(n)
    xp = _pad_rows(x2d, tm)
    mp = xp.shape[0]
    grid = (mp // tm, n // tn)

    if scale is None:
        kernel = _matmul_kernel
        in_specs = [pl.BlockSpec((tm, k), lambda i, j: (i, 0)),
                    pl.BlockSpec((k, tn), lambda i, j: (0, j))]
        args = (xp, w_flat)
    else:
        kernel = _bn_relu_matmul_kernel
        st = jnp.stack([scale, shift]).astype(jnp.float32)   # (2, K): one DMA stream
        in_specs = [pl.BlockSpec((tm, k), lambda i, j: (i, 0)),
                    pl.BlockSpec((2, k), lambda i, j: (0, 0)),
                    pl.BlockSpec((k, tn), lambda i, j: (0, j))]
        args = (xp, st, w_flat)

    y = pl.pallas_call(
        kernel,
        out_shape=jax.ShapeDtypeStruct((mp, n), out_dtype),
        grid=grid,
        in_specs=in_specs,
        out_specs=pl.BlockSpec((tm, tn), lambda i, j: (i, j)),
        compiler_params=pltpu.CompilerParams(
            dimension_semantics=("parallel", "parallel"),
            vmem_limit_bytes=_VMEM_LIMIT),
    )(*args)
    return y[:m] if mp != m else y


def pallas_bias_tanh(x2d, bias_row):
    """tanh(x + bias_row) on a lane-dense (rows, 2W*C_pad) layout, f32 out."""
    m, n = x2d.shape
    tm = _pick_tm(m, _MAX_TM)
    xp = _pad_rows(x2d, tm)
    mp = xp.shape[0]
    y = pl.pallas_call(
        _bias_tanh_kernel,
        out_shape=jax.ShapeDtypeStruct((mp, n), jnp.float32),
        grid=(mp // tm,),
        in_specs=[pl.BlockSpec((tm, n), lambda i: (i, 0)),
                  pl.BlockSpec((1, n), lambda i: (0, 0))],
        out_specs=pl.BlockSpec((tm, n), lambda i: (i, 0)),
        compiler_params=pltpu.CompilerParams(
            dimension_semantics=("parallel",),
            vmem_limit_bytes=_VMEM_LIMIT),
    )(xp, bias_row.reshape(1, n).astype(jnp.float32))
    return y[:m] if mp != m else y


# ------------------------- ConvTranspose2d plumbing -------------------------

def _deconv_weight_flat(w_iokk, c_out_pad=None):
    """PyTorch ConvTranspose2d weight (C_in, C_out, 4, 4) -> (C_in, 16*C_out)
    bf16, column order (kh, kw, c_out).  Optional zero-padding of C_out so the
    matmul lane width 16*C_out is a multiple of 128 (unmasked stores)."""
    c_in, c_out = w_iokk.shape[0], w_iokk.shape[1]
    if c_out_pad is not None and c_out_pad > c_out:
        w_iokk = jnp.pad(w_iokk, ((0, 0), (0, c_out_pad - c_out), (0, 0), (0, 0)))
        c_out = c_out_pad
    return (jnp.transpose(w_iokk, (0, 2, 3, 1))
            .reshape(c_in, 16 * c_out).astype(jnp.bfloat16))


def _overlap_add_2x(y):
    """Tap overlap-add of ConvT(k=4, s=2, p=1), accumulated in f32.

    y: (B, H, W, 4, 4, C) with y[b, ih, iw, kh, kw, c] contributing to output
    position (2*ih - 1 + kh, 2*iw - 1 + kw).  Returns (B, 2H, 2W, C) f32.
    Dense pads/adds/interleaves only (XLA-fused; no scatter HLO)."""
    y = y.astype(jnp.float32)
    B, H, W, _, _, C = y.shape
    ev_h = y[:, :, :, 1] + jnp.pad(y[:, :-1, :, 3],
                                   ((0, 0), (1, 0), (0, 0), (0, 0), (0, 0)))
    od_h = y[:, :, :, 2] + jnp.pad(y[:, 1:, :, 0],
                                   ((0, 0), (0, 1), (0, 0), (0, 0), (0, 0)))
    zh = jnp.stack([ev_h, od_h], axis=2).reshape(B, 2 * H, W, 4, C)
    ev_w = zh[:, :, :, 1] + jnp.pad(zh[:, :, :-1, 3],
                                    ((0, 0), (0, 0), (1, 0), (0, 0)))
    od_w = zh[:, :, :, 2] + jnp.pad(zh[:, :, 1:, 0],
                                    ((0, 0), (0, 0), (0, 1), (0, 0)))
    return jnp.stack([ev_w, od_w], axis=3).reshape(B, 2 * H, 2 * W, C)


def _bn_affine_from(z_f32, gamma, beta):
    """Training-mode BatchNorm2d (biased batch variance) as per-channel affine.
    Single-pass sum / sum-of-squares so XLA fuses the reductions with the
    overlap-add that produces z (no extra HBM read of z)."""
    cnt = z_f32.shape[0] * z_f32.shape[1] * z_f32.shape[2]
    s1 = jnp.sum(z_f32, axis=(0, 1, 2))
    s2 = jnp.sum(z_f32 * z_f32, axis=(0, 1, 2))
    mean = s1 / cnt
    var = jnp.maximum(s2 / cnt - mean * mean, 0.0)
    scale = gamma * jax.lax.rsqrt(var + _BN_EPS)
    shift = beta - mean * scale
    return scale, shift


# ------------------------------ parameter init ------------------------------

def init_params(key, i_size, o_channels, feature_maps, h_layers):
    """Synthetic params mirroring init_weights: conv ~ N(0, 0.02),
    BN gamma ~ N(1, 0.02), BN beta = 0."""
    layers = []
    c0 = (2 ** h_layers) * feature_maps
    key, k1, k2 = jax.random.split(key, 3)
    layers.append(dict(
        w=0.02 * jax.random.normal(k1, (i_size, c0, 4, 4), jnp.float32),
        gamma=1.0 + 0.02 * jax.random.normal(k2, (c0,), jnp.float32),
        beta=jnp.zeros((c0,), jnp.float32)))
    c_prev = c0
    for h in range(h_layers):
        c_out = (2 ** (h_layers - h - 1)) * feature_maps
        key, k1, k2 = jax.random.split(key, 3)
        layers.append(dict(
            w=0.02 * jax.random.normal(k1, (c_prev, c_out, 4, 4), jnp.float32),
            gamma=1.0 + 0.02 * jax.random.normal(k2, (c_out,), jnp.float32),
            beta=jnp.zeros((c_out,), jnp.float32)))
        c_prev = c_out
    key, k1, k2 = jax.random.split(key, 3)
    final = dict(
        w=0.02 * jax.random.normal(k1, (c_prev, o_channels, 4, 4), jnp.float32),
        b=0.02 * jax.random.normal(k2, (o_channels,), jnp.float32))
    return layers, final


def prepare_params(layers, final):
    """One-time (outside jit) weight flattening / bf16 cast / channel padding."""
    prep_layers = [dict(w=_deconv_weight_flat(p['w']),
                        gamma=p['gamma'].astype(jnp.float32),
                        beta=p['beta'].astype(jnp.float32))
                   for p in layers]
    c_out = int(final['w'].shape[1])
    c_pad = _round_up(c_out, 8)          # 16*c_pad is a multiple of 128
    prep_final = dict(w=_deconv_weight_flat(final['w'], c_pad),
                      b=jnp.pad(final['b'], (0, c_pad - c_out)).astype(jnp.float32))
    return prep_layers, prep_final


# --------------------------------- forward ----------------------------------

def cnn_deconv_forward(x, prep_layers, prep_final, o_channels):
    """x: (B, i_size) -> (B, o_channels, 2**(h+3), 2**(h+3)) NCHW (matches torch)."""
    b = x.shape[0]
    x2d = x.reshape(b, -1)               # torch: reshape to (B, i_size, 1, 1)

    # layer 0: ConvT(4, s=1, p=0) on a 1x1 input == one matmul whose 16 taps
    # ARE the 4x4 output image (pure depth-to-space).
    p0 = prep_layers[0]
    c0 = p0['w'].shape[1] // 16
    y = matmul_bn_relu(x2d.astype(jnp.float32), p0['w'])
    z = y.reshape(b, 4, 4, c0).astype(jnp.float32)               # NHWC, pre-BN
    h = w = 4
    gamma, beta = p0['gamma'], p0['beta']

    # hidden layers: previous layer's BN+ReLU fused into this layer's matmul
    # prologue; tap overlap-add produces the 2x-upsampled pre-BN activations.
    for p in prep_layers[1:]:
        c_out = p['w'].shape[1] // 16
        scale, shift = _bn_affine_from(z, gamma, beta)
        y = matmul_bn_relu(z.reshape(b * h * w, -1).astype(jnp.bfloat16),
                           p['w'], scale=scale, shift=shift)      # (B*H*W, 16*c_out)
        z = _overlap_add_2x(y.reshape(b, h, w, 4, 4, c_out))      # (B, 2H, 2W, c_out) f32
        h, w = 2 * h, 2 * w
        gamma, beta = p['gamma'], p['beta']

    # final layer: last hidden BN+ReLU fused into the matmul (channel-padded,
    # lane-dense N), overlap-add, then bias + tanh on a (B*2H, 2W*C_pad) slab.
    c_pad = prep_final['w'].shape[1] // 16
    scale, shift = _bn_affine_from(z, gamma, beta)
    y = matmul_bn_relu(z.reshape(b * h * w, -1).astype(jnp.bfloat16),
                       prep_final['w'], scale=scale, shift=shift)
    pre = _overlap_add_2x(y.reshape(b, h, w, 4, 4, c_pad))        # (B, 2H, 2W, c_pad)
    h, w = 2 * h, 2 * w
    out = pallas_bias_tanh(pre.reshape(b * h, w * c_pad),
                           jnp.tile(prep_final['b'], w))
    out = out.reshape(b, h, w, c_pad)[:, :, :, :o_channels]
    # TODO(synk): trailing NHWC->NCHW transpose is plain-JAX glue.
    return jnp.transpose(out, (0, 3, 1, 2))


# ----------------------------------- main ------------------------------------

if __name__ == "__main__":
    # Small config: i_size=16, o_channels=3, feature_maps=8, h_layers=2
    #  -> output (B, 3, 32, 32) since 2 ** (h_layers + 3) = 32.
    B, I_SIZE, O_CH, FM, HL = 4, 16, 3, 8, 2

    key = jax.random.PRNGKey(0)
    key, kx, kp = jax.random.split(key, 3)
    x = jax.random.normal(kx, (B, I_SIZE), jnp.float32)
    layers, final = init_params(kp, I_SIZE, O_CH, FM, HL)
    prep_layers, prep_final = prepare_params(layers, final)   # one-time, outside jit

    fwd = jax.jit(functools.partial(cnn_deconv_forward, o_channels=O_CH))
    out = jax.block_until_ready(fwd(x, prep_layers, prep_final))

    side = 2 ** (HL + 3)
    assert out.shape == (B, O_CH, side, side), out.shape
    assert bool(jnp.all(jnp.isfinite(out)))
    assert bool(jnp.all(jnp.abs(out) <= 1.0))   # tanh range
    print("KERNEL_OK")
</pallas_src>

<mosaic_0001>
module attributes {stable_mosaic.version = 11 : i64} {
  func.func @_bn_relu_matmul_kernel(%arg0: i32, %arg1: i32, %arg2: memref<128x16xbf16, #tpu.memory_space<vmem>>, %arg3: memref<2x16xf32, #tpu.memory_space<vmem>>, %arg4: memref<16x128xbf16, #tpu.memory_space<vmem>>, %arg5: memref<128x128xbf16, #tpu.memory_space<vmem>>) attributes {dimension_semantics = [#tpu.dimension_semantics<parallel>, #tpu.dimension_semantics<parallel>], iteration_bounds = array<i64: 2, 1>, scalar_prefetch = 0 : i64, scratch_operands = 0 : i64, tpu.core_type = #tpu.core_type<tc>, window_params = [{transform_indices = @transform_0, window_bounds = array<i64: 128, 16>}, {pipeline_mode = #tpu.pipeline_mode<synchronous>, transform_indices = @transform_1, window_bounds = array<i64: 2, 16>}, {transform_indices = @transform_2, window_bounds = array<i64: 16, 128>}, {transform_indices = @transform_3, window_bounds = array<i64: 128, 128>}]} {
    %c0 = arith.constant 0 : index
    %c0_0 = arith.constant 0 : index
    %0 = vector.load %arg2[%c0, %c0_0] : memref<128x16xbf16, #tpu.memory_space<vmem>>, vector<128x16xbf16>
    %1 = arith.extf %0 : vector<128x16xbf16> to vector<128x16xf32>
    %c0_1 = arith.constant 0 : index
    %c0_2 = arith.constant 0 : index
    %2 = vector.load %arg3[%c0_1, %c0_2] : memref<2x16xf32, #tpu.memory_space<vmem>>, vector<1x16xf32>
    %3 = vector.broadcast %2 : vector<1x16xf32> to vector<128x16xf32>
    %4 = arith.mulf %1, %3 : vector<128x16xf32>
    %c1 = arith.constant 1 : index
    %c0_3 = arith.constant 0 : index
    %5 = vector.load %arg3[%c1, %c0_3] : memref<2x16xf32, #tpu.memory_space<vmem>>, vector<1x16xf32>
    %6 = vector.broadcast %5 : vector<1x16xf32> to vector<128x16xf32>
    %7 = arith.addf %4, %6 : vector<128x16xf32>
    %cst = arith.constant 0.000000e+00 : f32
    %8 = vector.broadcast %cst : f32 to vector<128x16xf32>
    %9 = arith.maximumf %7, %8 : vector<128x16xf32>
    %10 = arith.truncf %9 : vector<128x16xf32> to vector<128x16xbf16>
    %c0_4 = arith.constant 0 : index
    %c0_5 = arith.constant 0 : index
    %11 = vector.load %arg4[%c0_4, %c0_5] : memref<16x128xbf16, #tpu.memory_space<vmem>>, vector<16x128xbf16>
    %cst_6 = arith.constant dense<0.000000e+00> : vector<128x128xf32>
    %12 = tpu.matmul %10, %11, %cst_6 {dimension_numbers = #tpu.dot_dimension_numbers<[1], [0], [0], [1], [0, 0, 1, 1], [], []>} : vector<128x16xbf16>, vector<16x128xbf16>, vector<128x128xf32> -> vector<128x128xf32>
    %13 = arith.truncf %12 : vector<128x128xf32> to vector<128x128xbf16>
    %c0_7 = arith.constant 0 : index
    %c0_8 = arith.constant 0 : index
    %14 = vector.load %arg5[%c0_7, %c0_8] : memref<128x128xbf16, #tpu.memory_space<vmem>>, vector<128x128xbf16>
    tpu.vector_store %arg5[%c0_7, %c0_8], %13 {strides = array<i32>} : memref<128x128xbf16, #tpu.memory_space<vmem>>, vector<128x128xbf16>,
    return
  }
  func.func @transform_0(%arg0: i32, %arg1: i32) -> (i32, i32) {
    %c0_i32 = arith.constant 0 : i32
    %c0_i32_0 = arith.constant 0 : i32
    return %arg0, %c0_i32 : i32, i32
  }
  func.func @transform_1(%arg0: i32, %arg1: i32) -> (i32, i32) {
    %c0_i32 = arith.constant 0 : i32
    %c0_i32_0 = arith.constant 0 : i32
    %c0_i32_1 = arith.constant 0 : i32
    return %c0_i32, %c0_i32_0 : i32, i32
  }
  func.func @transform_2(%arg0: i32, %arg1: i32) -> (i32, i32) {
    %c0_i32 = arith.constant 0 : i32
    %c0_i32_0 = arith.constant 0 : i32
    return %c0_i32, %arg1 : i32, i32
  }
  func.func @transform_3(%arg0: i32, %arg1: i32) -> (i32, i32) {
    %c0_i32 = arith.constant 0 : i32
    return %arg0, %arg1 : i32, i32
  }
}

module attributes {stable_mosaic.version = 11 : i64} {
  func.func @_bn_relu_matmul_kernel(%arg0: i32, %arg1: i32, %arg2: memref<512x8xbf16, #tpu.memory_space<vmem>>, %arg3: memref<2x8xf32, #tpu.memory_space<vmem>>, %arg4: memref<8x128xbf16, #tpu.memory_space<vmem>>, %arg5: memref<512x128xbf16, #tpu.memory_space<vmem>>) attributes {dimension_semantics = [#tpu.dimension_semantics<parallel>, #tpu.dimension_semantics<parallel>], iteration_bounds = array<i64: 2, 1>, scalar_prefetch = 0 : i64, scratch_operands = 0 : i64, tpu.core_type = #tpu.core_type<tc>, window_params = [{transform_indices = @transform_0, window_bounds = array<i64: 512, 8>}, {pipeline_mode = #tpu.pipeline_mode<synchronous>, transform_indices = @transform_1, window_bounds = array<i64: 2, 8>}, {transform_indices = @transform_2, window_bounds = array<i64: 8, 128>}, {transform_indices = @transform_3, window_bounds = array<i64: 512, 128>}]} {
    %c0 = arith.constant 0 : index
    %c0_0 = arith.constant 0 : index
    %0 = vector.load %arg2[%c0, %c0_0] : memref<512x8xbf16, #tpu.memory_space<vmem>>, vector<512x8xbf16>
    %1 = arith.extf %0 : vector<512x8xbf16> to vector<512x8xf32>
    %c0_1 = arith.constant 0 : index
    %c0_2 = arith.constant 0 : index
    %2 = vector.load %arg3[%c0_1, %c0_2] : memref<2x8xf32, #tpu.memory_space<vmem>>, vector<1x8xf32>
    %3 = vector.broadcast %2 : vector<1x8xf32> to vector<512x8xf32>
    %4 = arith.mulf %1, %3 : vector<512x8xf32>
    %c1 = arith.constant 1 : index
    %c0_3 = arith.constant 0 : index
    %5 = vector.load %arg3[%c1, %c0_3] : memref<2x8xf32, #tpu.memory_space<vmem>>, vector<1x8xf32>
    %6 = vector.broadcast %5 : vector<1x8xf32> to vector<512x8xf32>
    %7 = arith.addf %4, %6 : vector<512x8xf32>
    %cst = arith.constant 0.000000e+00 : f32
    %8 = vector.broadcast %cst : f32 to vector<512x8xf32>
    %9 = arith.maximumf %7, %8 : vector<512x8xf32>
    %10 = arith.truncf %9 : vector<512x8xf32> to vector<512x8xbf16>
    %c0_4 = arith.constant 0 : index
    %c0_5 = arith.constant 0 : index
    %11 = vector.load %arg4[%c0_4, %c0_5] : memref<8x128xbf16, #tpu.memory_space<vmem>>, vector<8x128xbf16>
    %cst_6 = arith.constant dense<0.000000e+00> : vector<512x128xf32>
    %12 = tpu.matmul %10, %11, %cst_6 {dimension_numbers = #tpu.dot_dimension_numbers<[1], [0], [0], [1], [0, 0, 1, 1], [], []>} : vector<512x8xbf16>, vector<8x128xbf16>, vector<512x128xf32> -> vector<512x128xf32>
    %13 = arith.truncf %12 : vector<512x128xf32> to vector<512x128xbf16>
    %c0_7 = arith.constant 0 : index
    %c0_8 = arith.constant 0 : index
    %14 = vector.load %arg5[%c0_7, %c0_8] : memref<512x128xbf16, #tpu.memory_space<vmem>>, vector<512x128xbf16>
    tpu.vector_store %arg5[%c0_7, %c0_8], %13 {strides = array<i32>} : memref<512x128xbf16, #tpu.memory_space<vmem>>, vector<512x128xbf16>,
    return
  }
  func.func @transform_0(%arg0: i32, %arg1: i32) -> (i32, i32) {
    %c0_i32 = arith.constant 0 : i32
    %c0_i32_0 = arith.constant 0 : i32
    return %arg0, %c0_i32 : i32, i32
  }
  func.func @transform_1(%arg0: i32, %arg1: i32) -> (i32, i32) {
    %c0_i32 = arith.constant 0 : i32
    %c0_i32_0 = arith.constant 0 : i32
    %c0_i32_1 = arith.constant 0 : i32
    return %c0_i32, %c0_i32_0 : i32, i32
  }
  func.func @transform_2(%arg0: i32, %arg1: i32) -> (i32, i32) {
    %c0_i32 = arith.constant 0 : i32
    %c0_i32_0 = arith.constant 0 : i32
    return %c0_i32, %arg1 : i32, i32
  }
  func.func @transform_3(%arg0: i32, %arg1: i32) -> (i32, i32) {
    %c0_i32 = arith.constant 0 : i32
    return %arg0, %arg1 : i32, i32
  }
}

module attributes {stable_mosaic.version = 11 : i64} {
  func.func @_bias_tanh_kernel(%arg0: i32, %arg1: memref<64x256xf32, #tpu.memory_space<vmem>>, %arg2: memref<1x256xf32, #tpu.memory_space<vmem>>, %arg3: memref<64x256xf32, #tpu.memory_space<vmem>>) attributes {dimension_semantics = [#tpu.dimension_semantics<parallel>], iteration_bounds = array<i64: 2>, scalar_prefetch = 0 : i64, scratch_operands = 0 : i64, tpu.core_type = #tpu.core_type<tc>, window_params = [{transform_indices = @transform_0, window_bounds = array<i64: 64, 256>}, {pipeline_mode = #tpu.pipeline_mode<synchronous>, transform_indices = @transform_1, window_bounds = array<i64: 1, 256>}, {transform_indices = @transform_2, window_bounds = array<i64: 64, 256>}]} {
    %c0 = arith.constant 0 : index
    %c0_0 = arith.constant 0 : index
    %0 = vector.load %arg1[%c0, %c0_0] : memref<64x256xf32, #tpu.memory_space<vmem>>, vector<64x256xf32>
    %c0_1 = arith.constant 0 : index
    %c0_2 = arith.constant 0 : index
    %1 = vector.load %arg2[%c0_1, %c0_2] : memref<1x256xf32, #tpu.memory_space<vmem>>, vector<1x256xf32>
    %2 = vector.broadcast %1 : vector<1x256xf32> to vector<64x256xf32>
    %3 = arith.addf %0, %2 : vector<64x256xf32>
    %4 = math.tanh %3 : vector<64x256xf32>
    %c0_3 = arith.constant 0 : index
    %c0_4 = arith.constant 0 : index
    %5 = vector.load %arg3[%c0_3, %c0_4] : memref<64x256xf32, #tpu.memory_space<vmem>>, vector<64x256xf32>
    tpu.vector_store %arg3[%c0_3, %c0_4], %4 {strides = array<i32>} : memref<64x256xf32, #tpu.memory_space<vmem>>, vector<64x256xf32>,
    return
  }
  func.func @transform_0(%arg0: i32) -> (i32, i32) {
    %c0_i32 = arith.constant 0 : i32
    %c0_i32_0 = arith.constant 0 : i32
    return %arg0, %c0_i32 : i32, i32
  }
  func.func @transform_1(%arg0: i32) -> (i32, i32) {
    %c0_i32 = arith.constant 0 : i32
    %c0_i32_0 = arith.constant 0 : i32
    %c0_i32_1 = arith.constant 0 : i32
    return %c0_i32, %c0_i32_0 : i32, i32
  }
  func.func @transform_2(%arg0: i32) -> (i32, i32) {
    %c0_i32 = arith.constant 0 : i32
    %c0_i32_0 = arith.constant 0 : i32
    return %arg0, %c0_i32 : i32, i32
  }
}

</mosaic_0001>

<llo_original>
// kernel: cnn_deconv_forward.3
$region0: #{cnn_deconv_forward.3}
  #allocation0 [shape = 'u32[]', space=smem, size = 0x4, offset = 0x4, fixed_abs, tag = 'smem constant byte address 0x4 - core index']
  #allocation1 [shape = 'u32[144,128]{1,0:T(1,128)}', space=vmem, size = 0x12000, scoped, tag = 'internal scratch']
  %s0 = inlined_call_operand.vmem [shape: bf16[256,16], index: 0, kind: input, shape index: {}]
  %s1 = inlined_call_operand.vmem [shape: f32[2,16], index: 1, kind: input, shape index: {}]
  %s2 = inlined_call_operand.vmem [shape: bf16[16,128], index: 2, kind: input, shape index: {}]
  %s3 = inlined_call_operand.vmem [shape: bf16[256,128], index: 3, kind: output, shape index: {}]
  %s4 = sld [smem:[#allocation0]]
  $region45: #{cnn_deconv_forward.3} parent=0
    _
  %s6 = ssub.s32 1, %s4
  %s7 = scalar_select 0, %s6, %s4
  loop: start=0, step=1, limit=4
  $region2: #{cnn_deconv_forward.3} parent=0 // loop_pre_header
    _
  $region3: #{cnn_deconv_forward.3} parent=0 // loop_header
    %s9 = sphi 0, %s13
    %p10 = scmp.ge.s32.totalorder %s9, 4
    %s16 = sphi 0, %s28
    %s17 = sphi 0, %s24
    %s18 = sphi 0, %s16
    %s19 = sphi 0, %s17
    %s20 = sphi 0, %s18
    %s21 = sphi 0, %s19
    %s31 = sphi 0, %s33
    %s34 = sphi 0, %s31
    %s35 = sphi 0, %s34
    %s51 = sphi 0, %s35
    %s55 = sphi 0, %s55
    %s57 = sphi 0, %s55
    %s58 = sphi 0, %s57
    %s72 = sphi 0, %s58
    %s78 = sphi 0, %s80
    %s81 = sphi 0, %s78
    %s82 = sphi 0, %s81
    %s98 = sphi 0, %s82
    %s106 = sphi 0, %s108
    %s109 = sphi 0, %s106
    %s110 = sphi 0, %s109
    %s126 = sphi 0, %s110
  $region4: #{cnn_deconv_forward.3} parent=0 // loop_header_branch
    %12 = sbr.rel (%p10) target = $region8
  $region5: #{cnn_deconv_forward.3} parent=0 // loop_body
    %s14 = ssub.s32 %s9, 1
    %s15 = ssub.s32 %s9, 2
    %s22 = sadd.s32 1, %s17
    %p23 = scmp.ge.s32.totalorder %s22, 1
    %s24 = scalar_select %p23, 0, %s22
    %s25 = sadd.s32 1, %s16
    %s26 = scalar_select %p23, %s25, %s16
    %p27 = scmp.ge.s32.totalorder %s26, 2
    %s28 = scalar_select %p27, 0, %s26
    %s29 = ssub.s32 %s16, %s28
    %p30 = scmp.eq.s32.totalorder %s29, 0
    %s32 = sadd.s32 %s31, 1
    %s33 = scalar_select %p30, %s31, %s32
    %p36 = pneg %p30
    %p37 = scmp.eq.s32.totalorder %s9, 1
    %p38 = por %p36, %p37
    %p39 = scmp.ne.s32.totalorder %s31, %s34
    %p40 = scmp.eq.s32.totalorder %s9, 0
    %p41 = por %p39, %p40
    %p42 = scmp.ne.s32.totalorder %s31, %s34
    %p43 = scmp.eq.s32.totalorder %s14, 1
    %p44 = por %p42, %p43
    %p45 = scmp.ne.s32.totalorder %s34, %s35
    %p46 = scmp.eq.s32.totalorder %s14, 0
    %p47 = por %p45, %p46
    %p48 = scmp.ne.s32.totalorder %s34, %s35
    %p49 = scmp.eq.s32.totalorder %s15, 1
    %p50 = por %p48, %p49
    %p52 = scmp.ne.s32.totalorder %s35, %s51
    %p53 = scmp.eq.s32.totalorder %s15, 0
    %p54 = por %p52, %p53
    %s56 = sadd.s32 %s55, 1
    %p59 = scmp.eq.s32.totalorder %s9, 1
    %p60 = scmp.ne.s32.totalorder %s55, %s57
    %p61 = scmp.eq.s32.totalorder %s9, 0
    %p62 = por %p60, %p61
    %p63 = scmp.ne.s32.totalorder %s55, %s57
    %p64 = scmp.eq.s32.totalorder %s14, 1
    %p65 = por %p63, %p64
    %p66 = scmp.ne.s32.totalorder %s57, %s58
    %p67 = scmp.eq.s32.totalorder %s14, 0
    %p68 = por %p66, %p67
    %p69 = scmp.ne.s32.totalorder %s57, %s58
    %p70 = scmp.eq.s32.totalorder %s15, 1
    %p71 = por %p69, %p70
    %p73 = scmp.ne.s32.totalorder %s58, %s72
    %p74 = scmp.eq.s32.totalorder %s15, 0
    %p75 = por %p73, %p74
    %s76 = ssub.s32 %s17, %s24
    %p77 = scmp.eq.s32.totalorder %s76, 0
    %s79 = sadd.s32 %s78, 1
    %s80 = scalar_select %p77, %s78, %s79
    %p83 = pneg %p77
    %p84 = scmp.eq.s32.totalorder %s9, 1
    %p85 = por %p83, %p84
    %p86 = scmp.ne.s32.totalorder %s78, %s81
    %p87 = scmp.eq.s32.totalorder %s9, 0
    %p88 = por %p86, %p87
    %p89 = scmp.ne.s32.totalorder %s78, %s81
    %p90 = scmp.eq.s32.totalorder %s14, 1
    %p91 = por %p89, %p90
    %p92 = scmp.ne.s32.totalorder %s81, %s82
    %p93 = scmp.eq.s32.totalorder %s14, 0
    %p94 = por %p92, %p93
    %p95 = scmp.ne.s32.totalorder %s81, %s82
    %p96 = scmp.eq.s32.totalorder %s15, 1
    %p97 = por %p95, %p96
    %p99 = scmp.ne.s32.totalorder %s82, %s98
    %p100 = scmp.eq.s32.totalorder %s15, 0
    %p101 = por %p99, %p100
    %s102 = ssub.s32 %s16, %s28
    %s103 = ssub.s32 %s17, %s24
    %s104 = sor.u32 %s102, %s103
    %p105 = scmp.eq.s32.totalorder %s104, 0
    %s107 = sadd.s32 %s106, 1
    %s108 = scalar_select %p105, %s106, %s107
    %p111 = pneg %p105
    %p112 = scmp.eq.s32.totalorder %s9, 1
    %p113 = por %p111, %p112
    %p114 = scmp.ne.s32.totalorder %s106, %s109
    %p115 = scmp.eq.s32.totalorder %s9, 0
    %p116 = por %p114, %p115
    %p117 = scmp.ne.s32.totalorder %s106, %s109
    %p118 = scmp.eq.s32.totalorder %s14, 1
    %p119 = por %p117, %p118
    %p120 = scmp.ne.s32.totalorder %s109, %s110
    %p121 = scmp.eq.s32.totalorder %s14, 0
    %p122 = por %p120, %p121
    %p123 = scmp.ne.s32.totalorder %s109, %s110
    %p124 = scmp.eq.s32.totalorder %s15, 1
    %p125 = por %p123, %p124
    %p127 = scmp.ne.s32.totalorder %s110, %s126
    %p128 = scmp.eq.s32.totalorder %s15, 0
    %p129 = por %p127, %p128
    %p130 = scmp.le.s32.totalorder 1, %s9
    %p131 = scmp.lt.s32.totalorder %s9, 3
    %p132 = pnand %p130, %p131
    %p133 = pneg %p132
    // Predicated region
    $region9: #{cnn_deconv_forward.3} parent=5 // pred_check
      _
    $region10: #{cnn_deconv_forward.3} parent=5 // pred_check_branch
      %135 = sbr.rel (%p132) target = $region12
    $region11: #{cnn_deconv_forward.3} parent=5 // pred_region
      %s136 = ssub.s32 %s9, 1
      // Predicated region
      $region13: #{cnn_deconv_forward.3} parent=11 // pred_check
        %p137 = pneg %p68
      $region14: #{cnn_deconv_forward.3} parent=11 // pred_check_branch
        %139 = sbr.rel (%p137) target = $region16
      $region15: #{cnn_deconv_forward.3} parent=11 // pred_region
        _
      $region16: #{cnn_deconv_forward.3} parent=11 // pred_fallthru
        _
      // Predicated region
      $region17: #{cnn_deconv_forward.3} parent=11 // pred_check
        %p140 = pneg %p94
      $region18: #{cnn_deconv_forward.3} parent=11 // pred_check_branch
        %142 = sbr.rel (%p140) target = $region20
      $region19: #{cnn_deconv_forward.3} parent=11 // pred_region
        %p143 = scmp.lt.s32.totalorder %s19, 0
        %s144 = scalar_select %p143, %s19, 0
        %s145 = smul.addr %s144, 4
        %s146 = scalar_lea.vmem %s2, %s145
      $region20: #{cnn_deconv_forward.3} parent=11 // pred_fallthru
        _
    $region12: #{cnn_deconv_forward.3} parent=5 // pred_fallthru
      _
    %p147 = scmp.lt.s32.totalorder %s9, 2
    // Predicated region
    $region21: #{cnn_deconv_forward.3} parent=5 // pred_check
      %p148 = pneg %p147
    $region22: #{cnn_deconv_forward.3} parent=5 // pred_check_branch
      %150 = sbr.rel (%p148) target = $region24
    $region23: #{cnn_deconv_forward.3} parent=5 // pred_region
      // Predicated region
      $region25: #{cnn_deconv_forward.3} parent=23 // pred_check
        %p151 = pneg %p41
      $region26: #{cnn_deconv_forward.3} parent=23 // pred_check_branch
        %153 = sbr.rel (%p151) target = $region28
      $region27: #{cnn_deconv_forward.3} parent=23 // pred_region
        %s154 = smul.u32 16, %s16
        %p155 = scmp.lt.s32.totalorder %s154, 31
        %s156 = scalar_select %p155, %s154, 31
        %s157 = smul.addr %s156, 4
        %s158 = scalar_lea.vmem %s0, %s157
        %s159 = smul.u32 16, %s16
      $region28: #{cnn_deconv_forward.3} parent=23 // pred_fallthru
        _
    $region24: #{cnn_deconv_forward.3} parent=5 // pred_fallthru
      _
    %p160 = scmp.le.s32.totalorder 1, %s9
    %p161 = scmp.lt.s32.totalorder %s9, 3
    %p162 = pnand %p160, %p161
    %p163 = pneg %p162
    // Predicated region
    $region29: #{cnn_deconv_forward.3} parent=5 // pred_check
      _
    $region30: #{cnn_deconv_forward.3} parent=5 // pred_check_branch
      %165 = sbr.rel (%p162) target = $region32
    $region31: #{cnn_deconv_forward.3} parent=5 // pred_region
      %s166 = ssub.s32 %s9, 1
      %s167 = smul.u32 16, %s18
      %p168 = scmp.lt.s32.totalorder %s167, 31
      %s169 = scalar_select %p168, %s167, 31
      %s170 = smul.addr %s169, 4
      %s171 = scalar_lea.vmem %s0, %s170
      %p172 = pneg %p47
      %p173 = pneg %p44
      %p174 = pneg %p68
      %p175 = pneg %p65
      %p176 = scmp.lt.s32.totalorder %s19, 0
      %s177 = scalar_select %p176, %s19, 0
      %s178 = smul.addr %s177, 4
      %s179 = scalar_lea.vmem %s2, %s178
      %p180 = pneg %p94
      %p181 = pneg %p91
      %p182 = pneg %p122
      %p183 = pneg %p119
      %s184 = smul.u32 16, %s18
      %p185 = scmp.lt.s32.totalorder %s184, 31
      %s186 = scalar_select %p185, %s184, 31
      %p187 = scmp.lt.s32.totalorder %s19, 0
      %s188 = scalar_select %p187, %s19, 0
      %s189 = sadd.s32 %s188, %s186
      %s190 = smul.addr %s189, 4
      %s191 = scalar_lea.vmem %s3, %s190
      %s192 = smul.u32 16, %s18
      %p193 = scmp.lt.s32.totalorder %s192, 31
      %s194 = scalar_select %p193, %s192, 31
      %s195 = smul.addr %s194, 4
      %s196 = scalar_lea.vmem %s0, %s195
      %s197 = smul.u32 16, %s18
      %p198 = scmp.lt.s32.totalorder %s19, 0
      %s199 = scalar_select %p198, %s19, 0
      %s200 = smul.addr %s199, 4
      %s201 = scalar_lea.vmem %s2, %s200
      %s202 = smul.u32 16, %s18
      %p203 = scmp.lt.s32.totalorder %s202, 31
      %s204 = scalar_select %p203, %s202, 31
      %p205 = scmp.lt.s32.totalorder %s19, 0
      %s206 = scalar_select %p205, %s19, 0
      %s207 = sadd.s32 %s206, %s204
      %s208 = smul.addr %s207, 4
      %s209 = scalar_lea.vmem %s3, %s208
      %s210 = smul.u32 16, %s18
      %v212 = vld [vmem:[%s196] sm:$0xf]
      %v213 = vld [vmem:[%s196 + $0x4] sm:$0xf]
      %v214 = vld [vmem:[%s196 + $0x8] sm:$0xf]
      %v215 = vld [vmem:[%s196 + $0xc] sm:$0xf]
      %v216 = vld [vmem:[%s196 + $0x10] sm:$0xf]
      %v217 = vld [vmem:[%s196 + $0x14] sm:$0xf]
      %v218 = vld [vmem:[%s196 + $0x18] sm:$0xf]
      %v219 = vld [vmem:[%s196 + $0x1c] sm:$0xf]
      %v220 = vld [vmem:[%s196 + $0x20] sm:$0xf]
      %v221 = vld [vmem:[%s196 + $0x24] sm:$0xf]
      %v222 = vld [vmem:[%s196 + $0x28] sm:$0xf]
      %v223 = vld [vmem:[%s196 + $0x2c] sm:$0xf]
      %v224 = vld [vmem:[%s196 + $0x30] sm:$0xf]
      %v225 = vld [vmem:[%s196 + $0x34] sm:$0xf]
      %v226 = vld [vmem:[%s196 + $0x38] sm:$0xf]
      %v227 = vld [vmem:[%s196 + $0x3c] sm:$0xf]
      %v228 = vunpack.c.l.bf16 %v212
      %v229 = vunpack.c.l.bf16 %v213
      %v230 = vunpack.c.l.bf16 %v214
      %v231 = vunpack.c.l.bf16 %v215
      %v232 = vunpack.c.l.bf16 %v216
      %v233 = vunpack.c.l.bf16 %v217
      %v234 = vunpack.c.l.bf16 %v218
      %v235 = vunpack.c.l.bf16 %v219
      %v236 = vunpack.c.l.bf16 %v220
      %v237 = vunpack.c.l.bf16 %v221
      %v238 = vunpack.c.l.bf16 %v222
      %v239 = vunpack.c.l.bf16 %v223
      %v240 = vunpack.c.l.bf16 %v224
      %v241 = vunpack.c.l.bf16 %v225
      %v242 = vunpack.c.l.bf16 %v226
      %v243 = vunpack.c.l.bf16 %v227
      %v244 = vld [vmem:[%s1] sm:$0x1]
      %v245 = vlaneseq
      %v246 = vshrl.u32 %v245, 7
      %v247 = vsub.s32 0, %v246
      %v248 = vrot.slane %v244, %v247
      %v249 = vmul.f32 %v228, %v248
      %v250 = vmul.f32 %v229, %v248
      %v251 = vmul.f32 %v230, %v248
      %v252 = vmul.f32 %v231, %v248
      %v253 = vmul.f32 %v232, %v248
      %v254 = vmul.f32 %v233, %v248
      %v255 = vmul.f32 %v234, %v248
      %v256 = vmul.f32 %v235, %v248
      %v257 = vmul.f32 %v236, %v248
      %v258 = vmul.f32 %v237, %v248
      %v259 = vmul.f32 %v238, %v248
      %v260 = vmul.f32 %v239, %v248
      %v261 = vmul.f32 %v240, %v248
      %v262 = vmul.f32 %v241, %v248
      %v263 = vmul.f32 %v242, %v248
      %v264 = vmul.f32 %v243, %v248
      %v265 = vld [vmem:[%s1 + $0x1] sm:$0x1]
      %v266 = vlaneseq
      %v267 = vshrl.u32 %v266, 7
      %v268 = vsub.s32 0, %v267
      %v269 = vrot.slane %v265, %v268
      %v270 = vadd.f32 %v249, %v269
      %v271 = vadd.f32 %v250, %v269
      %v272 = vadd.f32 %v251, %v269
      %v273 = vadd.f32 %v252, %v269
      %v274 = vadd.f32 %v253, %v269
      %v275 = vadd.f32 %v254, %v269
      %v276 = vadd.f32 %v255, %v269
      %v277 = vadd.f32 %v256, %v269
      %v278 = vadd.f32 %v257, %v269
      %v279 = vadd.f32 %v258, %v269
      %v280 = vadd.f32 %v259, %v269
      %v281 = vadd.f32 %v260, %v269
      %v282 = vadd.f32 %v261, %v269
      %v283 = vadd.f32 %v262, %v269
      %v284 = vadd.f32 %v263, %v269
      %v285 = vadd.f32 %v264, %v269
      %v286 = vmax.f32 %v270, 0.0
      %v287 = vmax.f32 %v271, 0.0
      %v288 = vmax.f32 %v272, 0.0
      %v289 = vmax.f32 %v273, 0.0
      %v290 = vmax.f32 %v274, 0.0
      %v291 = vmax.f32 %v275, 0.0
      %v292 = vmax.f32 %v276, 0.0
      %v293 = vmax.f32 %v277, 0.0
      %v294 = vmax.f32 %v278, 0.0
      %v295 = vmax.f32 %v279, 0.0
      %v296 = vmax.f32 %v280, 0.0
      %v297 = vmax.f32 %v281, 0.0
      %v298 = vmax.f32 %v282, 0.0
      %v299 = vmax.f32 %v283, 0.0
      %v300 = vmax.f32 %v284, 0.0
      %v301 = vmax.f32 %v285, 0.0
      %v302 = vpack.c.bf16 %v287, %v286
      %v303 = vpack.c.bf16 %v289, %v288
      %v304 = vpack.c.bf16 %v291, %v290
      %v305 = vpack.c.bf16 %v293, %v292
      %v306 = vpack.c.bf16 %v295, %v294
      %v307 = vpack.c.bf16 %v297, %v296
      %v308 = vpack.c.bf16 %v299, %v298
      %v309 = vpack.c.bf16 %v301, %v300
      %v310 = vld [vmem:[%s201] sm:$0xf]
      %v311 = vld [vmem:[%s201 + $0x4] sm:$0xf]
      %v314 = vunpack.c.l.b16 %v310
      %v315 = vunpack.c.l.b16 %v311
      %v316 = vpack.c.b16 %v315, %v314
      %vm318 = vcmask 130048
      %v320 = vsel %vm318, %v302, 0
      %v323 = vsel %vm318, %v303, 0
      %v326 = vsel %vm318, %v304, 0
      %v329 = vsel %vm318, %v305, 0
      %v332 = vsel %vm318, %v306, 0
      %v335 = vsel %vm318, %v307, 0
      %v338 = vsel %vm318, %v308, 0
      %v341 = vsel %vm318, %v309, 0
      %343 = vmatprep.subr.bf16.mxu0 0
      %344 = vmatpush1.bf16.msra.mxu0 %v316
      %345 = vmatprep.subr.bf16.mxu0 0
      %346 = vmatpush1.bf16.msra.mxu0 0
      %347 = vmatprep.subr.bf16.mxu0 0
      %348 = vmatpush1.bf16.msra.mxu0 0
      %349 = vmatprep.subr.bf16.mxu0 0
      %350 = vmatpush1.bf16.msra.mxu0 0
      %351 = vmatprep.subr.bf16.mxu0 0
      %352 = vmatpush1.bf16.msra.mxu0 0
      %353 = vmatprep.subr.bf16.mxu0 0
      %354 = vmatpush1.bf16.msra.mxu0 0
      %355 = vmatprep.subr.bf16.mxu0 0
      %356 = vmatpush1.bf16.msra.mxu0 0
      %357 = vmatprep.subr.bf16.mxu0 0
      %358 = vmatpush1.bf16.msra.mxu0 0
      %359 = vmatprep.subr.bf16.mxu0 0
      %360 = vmatpush1.bf16.msra.mxu0 0
      %361 = vmatprep.subr.bf16.mxu0 0
      %362 = vmatpush1.bf16.msra.mxu0 0
      %363 = vmatprep.subr.bf16.mxu0 0
      %364 = vmatpush1.bf16.msra.mxu0 0
      %365 = vmatprep.subr.bf16.mxu0 0
      %366 = vmatpush1.bf16.msra.mxu0 0
      %367 = vmatprep.subr.bf16.mxu0 0
      %368 = vmatpush1.bf16.msra.mxu0 0
      %369 = vmatprep.subr.bf16.mxu0 0
      %370 = vmatpush1.bf16.msra.mxu0 0
      %371 = vmatprep.subr.bf16.mxu0 0
      %372 = vmatpush1.bf16.msra.mxu0 0
      %373 = vmatprep.subr.bf16.mxu0 0
      %374 = vmatpush1.bf16.msra.mxu0 0
      %375 = vmatprep.mubr.bf16.mxu0 0
      %376 = vmatmul.mubr.bf16.gmra.mrb[0].mxu0 %v320
      %v377 = vpop.f32.mrb[0].mxu0
      %v378 = vadd.f32 0.0, %v377
      %v379 = vpop.f32.mrb[0].mxu0
      %v380 = vpop.f32.mrb[0].mxu0
      %v381 = vadd.f32 0.0, %v380
      %v382 = vpop.f32.mrb[0].mxu0
      %383 = vmatprep.mubr.bf16.mxu0 0
      %384 = vmatmul.mubr.bf16.gmra.mrb[0].mxu0 %v323
      %v385 = vpop.f32.mrb[0].mxu0
      %v386 = vadd.f32 0.0, %v385
      %v387 = vpop.f32.mrb[0].mxu0
      %v388 = vpop.f32.mrb[0].mxu0
      %v389 = vadd.f32 0.0, %v388
      %v390 = vpop.f32.mrb[0].mxu0
      %391 = vmatprep.mubr.bf16.mxu0 0
      %392 = vmatmul.mubr.bf16.gmra.mrb[0].mxu0 %v326
      %v393 = vpop.f32.mrb[0].mxu0
      %v394 = vadd.f32 0.0, %v393
      %v395 = vpop.f32.mrb[0].mxu0
      %v396 = vpop.f32.mrb[0].mxu0
      %v397 = vadd.f32 0.0, %v396
      %v398 = vpop.f32.mrb[0].mxu0
      %399 = vmatprep.mubr.bf16.mxu0 0
      %400 = vmatmul.mubr.bf16.gmra.mrb[0].mxu0 %v329
      %v401 = vpop.f32.mrb[0].mxu0
      %v402 = vadd.f32 0.0, %v401
      %v403 = vpop.f32.mrb[0].mxu0
      %v404 = vpop.f32.mrb[0].mxu0
      %v405 = vadd.f32 0.0, %v404
      %v406 = vpop.f32.mrb[0].mxu0
      %407 = vmatprep.mubr.bf16.mxu0 0
      %408 = vmatmul.mubr.bf16.gmra.mrb[0].mxu0 %v332
      %v409 = vpop.f32.mrb[0].mxu0
      %v410 = vadd.f32 0.0, %v409
      %v411 = vpop.f32.mrb[0].mxu0
      %v412 = vpop.f32.mrb[0].mxu0
      %v413 = vadd.f32 0.0, %v412
      %v414 = vpop.f32.mrb[0].mxu0
      %415 = vmatprep.mubr.bf16.mxu0 0
      %416 = vmatmul.mubr.bf16.gmra.mrb[0].mxu0 %v335
      %v417 = vpop.f32.mrb[0].mxu0
      %v418 = vadd.f32 0.0, %v417
      %v419 = vpop.f32.mrb[0].mxu0
      %v420 = vpop.f32.mrb[0].mxu0
      %v421 = vadd.f32 0.0, %v420
      %v422 = vpop.f32.mrb[0].mxu0
      %423 = vmatprep.mubr.bf16.mxu0 0
      %424 = vmatmul.mubr.bf16.gmra.mrb[0].mxu0 %v338
      %v425 = vpop.f32.mrb[0].mxu0
      %v426 = vadd.f32 0.0, %v425
      %v427 = vpop.f32.mrb[0].mxu0
      %v428 = vpop.f32.mrb[0].mxu0
      %v429 = vadd.f32 0.0, %v428
      %v430 = vpop.f32.mrb[0].mxu0
      %431 = vmatprep.mubr.bf16.mxu0 0
      %432 = vmatmul.mubr.bf16.gmra.mrb[0].mxu0 %v341
      %v433 = vpop.f32.mrb[0].mxu0
      %v434 = vadd.f32 0.0, %v433
      %v435 = vpop.f32.mrb[0].mxu0
      %v436 = vpop.f32.mrb[0].mxu0
      %v437 = vadd.f32 0.0, %v436
      %v438 = vpop.f32.mrb[0].mxu0
      %439 = vdwg.mxu0
      %v440 = vpack.c.bf16 %v381, %v378
      %v441 = vpack.c.bf16 %v389, %v386
      %v442 = vpack.c.bf16 %v397, %v394
      %v443 = vpack.c.bf16 %v405, %v402
      %v444 = vpack.c.bf16 %v413, %v410
      %v445 = vpack.c.bf16 %v421, %v418
      %v446 = vpack.c.bf16 %v429, %v426
      %v447 = vpack.c.bf16 %v437, %v434
      %v456 = vunpack.c.l.b16 %v440
      %v457 = vunpack.c.h.b16 %v440
      %v458 = vunpack.c.l.b16 %v441
      %v459 = vunpack.c.h.b16 %v441
      %v460 = vunpack.c.l.b16 %v442
      %v461 = vunpack.c.h.b16 %v442
      %v462 = vunpack.c.l.b16 %v443
      %v463 = vunpack.c.h.b16 %v443
      %v464 = vunpack.c.l.b16 %v444
      %v465 = vunpack.c.h.b16 %v444
      %v466 = vunpack.c.l.b16 %v445
      %v467 = vunpack.c.h.b16 %v445
      %v468 = vunpack.c.l.b16 %v446
      %v469 = vunpack.c.h.b16 %v446
      %v470 = vunpack.c.l.b16 %v447
      %v471 = vunpack.c.h.b16 %v447
      %v472 = vpack.c.b16 %v456, %v456
      %v473 = vpack.c.b16 %v457, %v457
      %v474 = vpack.c.b16 %v458, %v458
      %v475 = vpack.c.b16 %v459, %v459
      %v476 = vpack.c.b16 %v460, %v460
      %v477 = vpack.c.b16 %v461, %v461
      %v478 = vpack.c.b16 %v462, %v462
      %v479 = vpack.c.b16 %v463, %v463
      %v480 = vpack.c.b16 %v464, %v464
      %v481 = vpack.c.b16 %v465, %v465
      %v482 = vpack.c.b16 %v466, %v466
      %v483 = vpack.c.b16 %v467, %v467
      %v484 = vpack.c.b16 %v468, %v468
      %v485 = vpack.c.b16 %v469, %v469
      %v486 = vpack.c.b16 %v470, %v470
      %v487 = vpack.c.b16 %v471, %v471
      %504 = vst [vmem:[%s209] sm:$0xf] %v472
      %505 = vst [vmem:[%s209 + $0x4] sm:$0xf] %v473
      %506 = vst [vmem:[%s209 + $0x8] sm:$0xf] %v474
      %507 = vst [vmem:[%s209 + $0xc] sm:$0xf] %v475
      %508 = vst [vmem:[%s209 + $0x10] sm:$0xf] %v476
      %509 = vst [vmem:[%s209 + $0x14] sm:$0xf] %v477
      %510 = vst [vmem:[%s209 + $0x18] sm:$0xf] %v478
      %511 = vst [vmem:[%s209 + $0x1c] sm:$0xf] %v479
      %512 = vst [vmem:[%s209 + $0x20] sm:$0xf] %v480
      %513 = vst [vmem:[%s209 + $0x24] sm:$0xf] %v481
      %514 = vst [vmem:[%s209 + $0x28] sm:$0xf] %v482
      %515 = vst [vmem:[%s209 + $0x2c] sm:$0xf] %v483
      %516 = vst [vmem:[%s209 + $0x30] sm:$0xf] %v484
      %517 = vst [vmem:[%s209 + $0x34] sm:$0xf] %v485
      %518 = vst [vmem:[%s209 + $0x38] sm:$0xf] %v486
      %519 = vst [vmem:[%s209 + $0x3c] sm:$0xf] %v487
      %s520 = smul.u32 16, %s18
      %p521 = scmp.lt.s32.totalorder %s520, 31
      %s522 = scalar_select %p521, %s520, 31
      %p523 = scmp.lt.s32.totalorder %s19, 0
      %s524 = scalar_select %p523, %s19, 0
      %s525 = sadd.s32 %s524, %s522
      %s526 = smul.addr %s525, 4
      %s527 = scalar_lea.vmem %s3, %s526
      // Predicated region
      $region33: #{cnn_deconv_forward.3} parent=31 // pred_check
        %p528 = pneg %p119
      $region34: #{cnn_deconv_forward.3} parent=31 // pred_check_branch
        %530 = sbr.rel (%p528) target = $region36
      $region35: #{cnn_deconv_forward.3} parent=31 // pred_region
        %s531 = smul.u32 16, %s18
      $region36: #{cnn_deconv_forward.3} parent=31 // pred_fallthru
        _
    $region32: #{cnn_deconv_forward.3} parent=5 // pred_fallthru
      _
    %p532 = scmp.le.s32.totalorder 2, %s9
    // Predicated region
    $region37: #{cnn_deconv_forward.3} parent=5 // pred_check
      %p533 = pneg %p532
    $region38: #{cnn_deconv_forward.3} parent=5 // pred_check_branch
      %535 = sbr.rel (%p533) target = $region40
    $region39: #{cnn_deconv_forward.3} parent=5 // pred_region
      %s536 = ssub.s32 %s9, 2
      // Predicated region
      $region41: #{cnn_deconv_forward.3} parent=39 // pred_check
        %p537 = pneg %p125
      $region42: #{cnn_deconv_forward.3} parent=39 // pred_check_branch
        %539 = sbr.rel (%p537) target = $region44
      $region43: #{cnn_deconv_forward.3} parent=39 // pred_region
        %s540 = smul.u32 16, %s20
        %p541 = scmp.lt.s32.totalorder %s540, 31
        %s542 = scalar_select %p541, %s540, 31
        %p543 = scmp.lt.s32.totalorder %s21, 0
        %s544 = scalar_select %p543, %s21, 0
        %s545 = sadd.s32 %s544, %s542
        %s546 = smul.addr %s545, 4
        %s547 = scalar_lea.vmem %s3, %s546
      $region44: #{cnn_deconv_forward.3} parent=39 // pred_fallthru
        _
    $region40: #{cnn_deconv_forward.3} parent=5 // pred_fallthru
      _
  $region6: #{cnn_deconv_forward.3} parent=0 // loop_footer
    %s13 = sadd.s32 1, %s9
  $region7: #{cnn_deconv_forward.3} parent=0 // loop_footer_branch
    %8 = sbr.rel target = $region3
  $region8: #{cnn_deconv_forward.3} parent=0 // loop_exit
    _

// kernel: cnn_deconv_forward.4
$region0: #{cnn_deconv_forward.4}
  #allocation0 [shape = 'u32[]', space=smem, size = 0x4, offset = 0x4, fixed_abs, tag = 'smem constant byte address 0x4 - core index']
  #allocation1 [shape = 'u32[144,128]{1,0:T(1,128)}', space=vmem, size = 0x12000, scoped, tag = 'internal scratch']
  %s0 = inlined_call_operand.vmem [shape: bf16[1024,8], index: 0, kind: input, shape index: {}]
  %s1 = inlined_call_operand.vmem [shape: f32[2,8], index: 1, kind: input, shape index: {}]
  %s2 = inlined_call_operand.vmem [shape: bf16[8,128], index: 2, kind: input, shape index: {}]
  %s3 = inlined_call_operand.vmem [shape: bf16[1024,128], index: 3, kind: output, shape index: {}]
  %s4 = sld [smem:[#allocation0]]
  $region45: #{cnn_deconv_forward.4} parent=0
    _
  %s6 = ssub.s32 1, %s4
  %s7 = scalar_select 0, %s6, %s4
  loop: start=0, step=1, limit=4
  $region2: #{cnn_deconv_forward.4} parent=0 // loop_pre_header
    _
  $region3: #{cnn_deconv_forward.4} parent=0 // loop_header
    %s9 = sphi 0, %s13
    %p10 = scmp.ge.s32.totalorder %s9, 4
    %s16 = sphi 0, %s28
    %s17 = sphi 0, %s24
    %s18 = sphi 0, %s16
    %s19 = sphi 0, %s17
    %s20 = sphi 0, %s18
    %s21 = sphi 0, %s19
    %s31 = sphi 0, %s33
    %s34 = sphi 0, %s31
    %s35 = sphi 0, %s34
    %s51 = sphi 0, %s35
    %s55 = sphi 0, %s55
    %s57 = sphi 0, %s55
    %s58 = sphi 0, %s57
    %s72 = sphi 0, %s58
    %s78 = sphi 0, %s80
    %s81 = sphi 0, %s78
    %s82 = sphi 0, %s81
    %s98 = sphi 0, %s82
    %s106 = sphi 0, %s108
    %s109 = sphi 0, %s106
    %s110 = sphi 0, %s109
    %s126 = sphi 0, %s110
  $region4: #{cnn_deconv_forward.4} parent=0 // loop_header_branch
    %12 = sbr.rel (%p10) target = $region8
  $region5: #{cnn_deconv_forward.4} parent=0 // loop_body
    %s14 = ssub.s32 %s9, 1
    %s15 = ssub.s32 %s9, 2
    %s22 = sadd.s32 1, %s17
    %p23 = scmp.ge.s32.totalorder %s22, 1
    %s24 = scalar_select %p23, 0, %s22
    %s25 = sadd.s32 1, %s16
    %s26 = scalar_select %p23, %s25, %s16
    %p27 = scmp.ge.s32.totalorder %s26, 2
    %s28 = scalar_select %p27, 0, %s26
    %s29 = ssub.s32 %s16, %s28
    %p30 = scmp.eq.s32.totalorder %s29, 0
    %s32 = sadd.s32 %s31, 1
    %s33 = scalar_select %p30, %s31, %s32
    %p36 = pneg %p30
    %p37 = scmp.eq.s32.totalorder %s9, 1
    %p38 = por %p36, %p37
    %p39 = scmp.ne.s32.totalorder %s31, %s34
    %p40 = scmp.eq.s32.totalorder %s9, 0
    %p41 = por %p39, %p40
    %p42 = scmp.ne.s32.totalorder %s31, %s34
    %p43 = scmp.eq.s32.totalorder %s14, 1
    %p44 = por %p42, %p43
    %p45 = scmp.ne.s32.totalorder %s34, %s35
    %p46 = scmp.eq.s32.totalorder %s14, 0
    %p47 = por %p45, %p46
    %p48 = scmp.ne.s32.totalorder %s34, %s35
    %p49 = scmp.eq.s32.totalorder %s15, 1
    %p50 = por %p48, %p49
    %p52 = scmp.ne.s32.totalorder %s35, %s51
    %p53 = scmp.eq.s32.totalorder %s15, 0
    %p54 = por %p52, %p53
    %s56 = sadd.s32 %s55, 1
    %p59 = scmp.eq.s32.totalorder %s9, 1
    %p60 = scmp.ne.s32.totalorder %s55, %s57
    %p61 = scmp.eq.s32.totalorder %s9, 0
    %p62 = por %p60, %p61
    %p63 = scmp.ne.s32.totalorder %s55, %s57
    %p64 = scmp.eq.s32.totalorder %s14, 1
    %p65 = por %p63, %p64
    %p66 = scmp.ne.s32.totalorder %s57, %s58
    %p67 = scmp.eq.s32.totalorder %s14, 0
    %p68 = por %p66, %p67
    %p69 = scmp.ne.s32.totalorder %s57, %s58
    %p70 = scmp.eq.s32.totalorder %s15, 1
    %p71 = por %p69, %p70
    %p73 = scmp.ne.s32.totalorder %s58, %s72
    %p74 = scmp.eq.s32.totalorder %s15, 0
    %p75 = por %p73, %p74
    %s76 = ssub.s32 %s17, %s24
    %p77 = scmp.eq.s32.totalorder %s76, 0
    %s79 = sadd.s32 %s78, 1
    %s80 = scalar_select %p77, %s78, %s79
    %p83 = pneg %p77
    %p84 = scmp.eq.s32.totalorder %s9, 1
    %p85 = por %p83, %p84
    %p86 = scmp.ne.s32.totalorder %s78, %s81
    %p87 = scmp.eq.s32.totalorder %s9, 0
    %p88 = por %p86, %p87
    %p89 = scmp.ne.s32.totalorder %s78, %s81
    %p90 = scmp.eq.s32.totalorder %s14, 1
    %p91 = por %p89, %p90
    %p92 = scmp.ne.s32.totalorder %s81, %s82
    %p93 = scmp.eq.s32.totalorder %s14, 0
    %p94 = por %p92, %p93
    %p95 = scmp.ne.s32.totalorder %s81, %s82
    %p96 = scmp.eq.s32.totalorder %s15, 1
    %p97 = por %p95, %p96
    %p99 = scmp.ne.s32.totalorder %s82, %s98
    %p100 = scmp.eq.s32.totalorder %s15, 0
    %p101 = por %p99, %p100
    %s102 = ssub.s32 %s16, %s28
    %s103 = ssub.s32 %s17, %s24
    %s104 = sor.u32 %s102, %s103
    %p105 = scmp.eq.s32.totalorder %s104, 0
    %s107 = sadd.s32 %s106, 1
    %s108 = scalar_select %p105, %s106, %s107
    %p111 = pneg %p105
    %p112 = scmp.eq.s32.totalorder %s9, 1
    %p113 = por %p111, %p112
    %p114 = scmp.ne.s32.totalorder %s106, %s109
    %p115 = scmp.eq.s32.totalorder %s9, 0
    %p116 = por %p114, %p115
    %p117 = scmp.ne.s32.totalorder %s106, %s109
    %p118 = scmp.eq.s32.totalorder %s14, 1
    %p119 = por %p117, %p118
    %p120 = scmp.ne.s32.totalorder %s109, %s110
    %p121 = scmp.eq.s32.totalorder %s14, 0
    %p122 = por %p120, %p121
    %p123 = scmp.ne.s32.totalorder %s109, %s110
    %p124 = scmp.eq.s32.totalorder %s15, 1
    %p125 = por %p123, %p124
    %p127 = scmp.ne.s32.totalorder %s110, %s126
    %p128 = scmp.eq.s32.totalorder %s15, 0
    %p129 = por %p127, %p128
    %p130 = scmp.le.s32.totalorder 1, %s9
    %p131 = scmp.lt.s32.totalorder %s9, 3
    %p132 = pnand %p130, %p131
    %p133 = pneg %p132
    // Predicated region
    $region9: #{cnn_deconv_forward.4} parent=5 // pred_check
      _
    $region10: #{cnn_deconv_forward.4} parent=5 // pred_check_branch
      %135 = sbr.rel (%p132) target = $region12
    $region11: #{cnn_deconv_forward.4} parent=5 // pred_region
      %s136 = ssub.s32 %s9, 1
      // Predicated region
      $region13: #{cnn_deconv_forward.4} parent=11 // pred_check
        %p137 = pneg %p68
      $region14: #{cnn_deconv_forward.4} parent=11 // pred_check_branch
        %139 = sbr.rel (%p137) target = $region16
      $region15: #{cnn_deconv_forward.4} parent=11 // pred_region
        _
      $region16: #{cnn_deconv_forward.4} parent=11 // pred_fallthru
        _
      // Predicated region
      $region17: #{cnn_deconv_forward.4} parent=11 // pred_check
        %p140 = pneg %p94
      $region18: #{cnn_deconv_forward.4} parent=11 // pred_check_branch
        %142 = sbr.rel (%p140) target = $region20
      $region19: #{cnn_deconv_forward.4} parent=11 // pred_region
        %p143 = scmp.lt.s32.totalorder %s19, 0
        %s144 = scalar_select %p143, %s19, 0
        %s145 = smul.addr %s144, 4
        %s146 = scalar_lea.vmem %s2, %s145
      $region20: #{cnn_deconv_forward.4} parent=11 // pred_fallthru
        _
    $region12: #{cnn_deconv_forward.4} parent=5 // pred_fallthru
      _
    %p147 = scmp.lt.s32.totalorder %s9, 2
    // Predicated region
    $region21: #{cnn_deconv_forward.4} parent=5 // pred_check
      %p148 = pneg %p147
    $region22: #{cnn_deconv_forward.4} parent=5 // pred_check_branch
      %150 = sbr.rel (%p148) target = $region24
    $region23: #{cnn_deconv_forward.4} parent=5 // pred_region
      // Predicated region
      $region25: #{cnn_deconv_forward.4} parent=23 // pred_check
        %p151 = pneg %p41
      $region26: #{cnn_deconv_forward.4} parent=23 // pred_check_branch
        %153 = sbr.rel (%p151) target = $region28
      $region27: #{cnn_deconv_forward.4} parent=23 // pred_region
        %s154 = smul.u32 64, %s16
        %p155 = scmp.lt.s32.totalorder %s154, 127
        %s156 = scalar_select %p155, %s154, 127
        %s157 = smul.addr %s156, 4
        %s158 = scalar_lea.vmem %s0, %s157
        %s159 = smul.u32 64, %s16
      $region28: #{cnn_deconv_forward.4} parent=23 // pred_fallthru
        _
    $region24: #{cnn_deconv_forward.4} parent=5 // pred_fallthru
      _
    %p160 = scmp.le.s32.totalorder 1, %s9
    %p161 = scmp.lt.s32.totalorder %s9, 3
    %p162 = pnand %p160, %p161
    %p163 = pneg %p162
    // Predicated region
    $region29: #{cnn_deconv_forward.4} parent=5 // pred_check
      _
    $region30: #{cnn_deconv_forward.4} parent=5 // pred_check_branch
      %165 = sbr.rel (%p162) target = $region32
    $region31: #{cnn_deconv_forward.4} parent=5 // pred_region
      %s166 = ssub.s32 %s9, 1
      %s167 = smul.u32 64, %s18
      %p168 = scmp.lt.s32.totalorder %s167, 127
      %s169 = scalar_select %p168, %s167, 127
      %s170 = smul.addr %s169, 4
      %s171 = scalar_lea.vmem %s0, %s170
      %p172 = pneg %p47
      %p173 = pneg %p44
      %p174 = pneg %p68
      %p175 = pneg %p65
      %p176 = scmp.lt.s32.totalorder %s19, 0
      %s177 = scalar_select %p176, %s19, 0
      %s178 = smul.addr %s177, 4
      %s179 = scalar_lea.vmem %s2, %s178
      %p180 = pneg %p94
      %p181 = pneg %p91
      %p182 = pneg %p122
      %p183 = pneg %p119
      %s184 = smul.u32 64, %s18
      %p185 = scmp.lt.s32.totalorder %s184, 127
      %s186 = scalar_select %p185, %s184, 127
      %p187 = scmp.lt.s32.totalorder %s19, 0
      %s188 = scalar_select %p187, %s19, 0
      %s189 = sadd.s32 %s188, %s186
      %s190 = smul.addr %s189, 4
      %s191 = scalar_lea.vmem %s3, %s190
      %s192 = smul.u32 64, %s18
      %p193 = scmp.lt.s32.totalorder %s192, 127
      %s194 = scalar_select %p193, %s192, 127
      %s195 = smul.addr %s194, 4
      %s196 = scalar_lea.vmem %s0, %s195
      %s197 = smul.u32 64, %s18
      %p198 = scmp.lt.s32.totalorder %s19, 0
      %s199 = scalar_select %p198, %s19, 0
      %s200 = smul.addr %s199, 4
      %s201 = scalar_lea.vmem %s2, %s200
      %s202 = smul.u32 64, %s18
      %p203 = scmp.lt.s32.totalorder %s202, 127
      %s204 = scalar_select %p203, %s202, 127
      %p205 = scmp.lt.s32.totalorder %s19, 0
      %s206 = scalar_select %p205, %s19, 0
      %s207 = sadd.s32 %s206, %s204
      %s208 = smul.addr %s207, 4
      %s209 = scalar_lea.vmem %s3, %s208
      %s210 = smul.u32 64, %s18
      %v212 = vld [vmem:[%s196] sm:$0xf]
      %v213 = vld [vmem:[%s196 + $0x4] sm:$0xf]
      %v214 = vld [vmem:[%s196 + $0x8] sm:$0xf]
      %v215 = vld [vmem:[%s196 + $0xc] sm:$0xf]
      %v216 = vld [vmem:[%s196 + $0x10] sm:$0xf]
      %v217 = vld [vmem:[%s196 + $0x14] sm:$0xf]
      %v218 = vld [vmem:[%s196 + $0x18] sm:$0xf]
      %v219 = vld [vmem:[%s196 + $0x1c] sm:$0xf]
      %v220 = vld [vmem:[%s196 + $0x20] sm:$0xf]
      %v221 = vld [vmem:[%s196 + $0x24] sm:$0xf]
      %v222 = vld [vmem:[%s196 + $0x28] sm:$0xf]
      %v223 = vld [vmem:[%s196 + $0x2c] sm:$0xf]
      %v224 = vld [vmem:[%s196 + $0x30] sm:$0xf]
      %v225 = vld [vmem:[%s196 + $0x34] sm:$0xf]
      %v226 = vld [vmem:[%s196 + $0x38] sm:$0xf]
      %v227 = vld [vmem:[%s196 + $0x3c] sm:$0xf]
      %v228 = vld [vmem:[%s196 + $0x40] sm:$0xf]
      %v229 = vld [vmem:[%s196 + $0x44] sm:$0xf]
      %v230 = vld [vmem:[%s196 + $0x48] sm:$0xf]
      %v231 = vld [vmem:[%s196 + $0x4c] sm:$0xf]
      %v232 = vld [vmem:[%s196 + $0x50] sm:$0xf]
      %v233 = vld [vmem:[%s196 + $0x54] sm:$0xf]
      %v234 = vld [vmem:[%s196 + $0x58] sm:$0xf]
      %v235 = vld [vmem:[%s196 + $0x5c] sm:$0xf]
      %v236 = vld [vmem:[%s196 + $0x60] sm:$0xf]
      %v237 = vld [vmem:[%s196 + $0x64] sm:$0xf]
      %v238 = vld [vmem:[%s196 + $0x68] sm:$0xf]
      %v239 = vld [vmem:[%s196 + $0x6c] sm:$0xf]
      %v240 = vld [vmem:[%s196 + $0x70] sm:$0xf]
      %v241 = vld [vmem:[%s196 + $0x74] sm:$0xf]
      %v242 = vld [vmem:[%s196 + $0x78] sm:$0xf]
      %v243 = vld [vmem:[%s196 + $0x7c] sm:$0xf]
      %v244 = vld [vmem:[%s196 + $0x80] sm:$0xf]
      %v245 = vld [vmem:[%s196 + $0x84] sm:$0xf]
      %v246 = vld [vmem:[%s196 + $0x88] sm:$0xf]
      %v247 = vld [vmem:[%s196 + $0x8c] sm:$0xf]
      %v248 = vld [vmem:[%s196 + $0x90] sm:$0xf]
      %v249 = vld [vmem:[%s196 + $0x94] sm:$0xf]
      %v250 = vld [vmem:[%s196 + $0x98] sm:$0xf]
      %v251 = vld [vmem:[%s196 + $0x9c] sm:$0xf]
      %v252 = vld [vmem:[%s196 + $0xa0] sm:$0xf]
      %v253 = vld [vmem:[%s196 + $0xa4] sm:$0xf]
      %v254 = vld [vmem:[%s196 + $0xa8] sm:$0xf]
      %v255 = vld [vmem:[%s196 + $0xac] sm:$0xf]
      %v256 = vld [vmem:[%s196 + $0xb0] sm:$0xf]
      %v257 = vld [vmem:[%s196 + $0xb4] sm:$0xf]
      %v258 = vld [vmem:[%s196 + $0xb8] sm:$0xf]
      %v259 = vld [vmem:[%s196 + $0xbc] sm:$0xf]
      %v260 = vld [vmem:[%s196 + $0xc0] sm:$0xf]
      %v261 = vld [vmem:[%s196 + $0xc4] sm:$0xf]
      %v262 = vld [vmem:[%s196 + $0xc8] sm:$0xf]
      %v263 = vld [vmem:[%s196 + $0xcc] sm:$0xf]
      %v264 = vld [vmem:[%s196 + $0xd0] sm:$0xf]
      %v265 = vld [vmem:[%s196 + $0xd4] sm:$0xf]
      %v266 = vld [vmem:[%s196 + $0xd8] sm:$0xf]
      %v267 = vld [vmem:[%s196 + $0xdc] sm:$0xf]
      %v268 = vld [vmem:[%s196 + $0xe0] sm:$0xf]
      %v269 = vld [vmem:[%s196 + $0xe4] sm:$0xf]
      %v270 = vld [vmem:[%s196 + $0xe8] sm:$0xf]
      %v271 = vld [vmem:[%s196 + $0xec] sm:$0xf]
      %v272 = vld [vmem:[%s196 + $0xf0] sm:$0xf]
      %v273 = vld [vmem:[%s196 + $0xf4] sm:$0xf]
      %v274 = vld [vmem:[%s196 + $0xf8] sm:$0xf]
      %v275 = vld [vmem:[%s196 + $0xfc] sm:$0xf]
      %v276 = vunpack.c.l.bf16 %v212
      %v277 = vunpack.c.l.bf16 %v213
      %v278 = vunpack.c.l.bf16 %v214
      %v279 = vunpack.c.l.bf16 %v215
      %v280 = vunpack.c.l.bf16 %v216
      %v281 = vunpack.c.l.bf16 %v217
      %v282 = vunpack.c.l.bf16 %v218
      %v283 = vunpack.c.l.bf16 %v219
      %v284 = vunpack.c.l.bf16 %v220
      %v285 = vunpack.c.l.bf16 %v221
      %v286 = vunpack.c.l.bf16 %v222
      %v287 = vunpack.c.l.bf16 %v223
      %v288 = vunpack.c.l.bf16 %v224
      %v289 = vunpack.c.l.bf16 %v225
      %v290 = vunpack.c.l.bf16 %v226
      %v291 = vunpack.c.l.bf16 %v227
      %v292 = vunpack.c.l.bf16 %v228
      %v293 = vunpack.c.l.bf16 %v229
      %v294 = vunpack.c.l.bf16 %v230
      %v295 = vunpack.c.l.bf16 %v231
      %v296 = vunpack.c.l.bf16 %v232
      %v297 = vunpack.c.l.bf16 %v233
      %v298 = vunpack.c.l.bf16 %v234
      %v299 = vunpack.c.l.bf16 %v235
      %v300 = vunpack.c.l.bf16 %v236
      %v301 = vunpack.c.l.bf16 %v237
      %v302 = vunpack.c.l.bf16 %v238
      %v303 = vunpack.c.l.bf16 %v239
      %v304 = vunpack.c.l.bf16 %v240
      %v305 = vunpack.c.l.bf16 %v241
      %v306 = vunpack.c.l.bf16 %v242
      %v307 = vunpack.c.l.bf16 %v243
      %v308 = vunpack.c.l.bf16 %v244
      %v309 = vunpack.c.l.bf16 %v245
      %v310 = vunpack.c.l.bf16 %v246
      %v311 = vunpack.c.l.bf16 %v247
      %v312 = vunpack.c.l.bf16 %v248
      %v313 = vunpack.c.l.bf16 %v249
      %v314 = vunpack.c.l.bf16 %v250
      %v315 = vunpack.c.l.bf16 %v251
      %v316 = vunpack.c.l.bf16 %v252
      %v317 = vunpack.c.l.bf16 %v253
      %v318 = vunpack.c.l.bf16 %v254
      %v319 = vunpack.c.l.bf16 %v255
      %v320 = vunpack.c.l.bf16 %v256
      %v321 = vunpack.c.l.bf16 %v257
      %v322 = vunpack.c.l.bf16 %v258
      %v323 = vunpack.c.l.bf16 %v259
      %v324 = vunpack.c.l.bf16 %v260
      %v325 = vunpack.c.l.bf16 %v261
      %v326 = vunpack.c.l.bf16 %v262
      %v327 = vunpack.c.l.bf16 %v263
      %v328 = vunpack.c.l.bf16 %v264
      %v329 = vunpack.c.l.bf16 %v265
      %v330 = vunpack.c.l.bf16 %v266
      %v331 = vunpack.c.l.bf16 %v267
      %v332 = vunpack.c.l.bf16 %v268
      %v333 = vunpack.c.l.bf16 %v269
      %v334 = vunpack.c.l.bf16 %v270
      %v335 = vunpack.c.l.bf16 %v271
      %v336 = vunpack.c.l.bf16 %v272
      %v337 = vunpack.c.l.bf16 %v273
      %v338 = vunpack.c.l.bf16 %v274
      %v339 = vunpack.c.l.bf16 %v275
      %v340 = vld [vmem:[%s1] sm:$0x1]
      %v341 = vlaneseq
      %v342 = vshrl.u32 %v341, 7
      %v343 = vsub.s32 0, %v342
      %v344 = vrot.slane %v340, %v343
      %v345 = vmul.f32 %v276, %v344
      %v346 = vmul.f32 %v277, %v344
      %v347 = vmul.f32 %v278, %v344
      %v348 = vmul.f32 %v279, %v344
      %v349 = vmul.f32 %v280, %v344
      %v350 = vmul.f32 %v281, %v344
      %v351 = vmul.f32 %v282, %v344
      %v352 = vmul.f32 %v283, %v344
      %v353 = vmul.f32 %v284, %v344
      %v354 = vmul.f32 %v285, %v344
      %v355 = vmul.f32 %v286, %v344
      %v356 = vmul.f32 %v287, %v344
      %v357 = vmul.f32 %v288, %v344
      %v358 = vmul.f32 %v289, %v344
      %v359 = vmul.f32 %v290, %v344
      %v360 = vmul.f32 %v291, %v344
      %v361 = vmul.f32 %v292, %v344
      %v362 = vmul.f32 %v293, %v344
      %v363 = vmul.f32 %v294, %v344
      %v364 = vmul.f32 %v295, %v344
      %v365 = vmul.f32 %v296, %v344
      %v366 = vmul.f32 %v297, %v344
      %v367 = vmul.f32 %v298, %v344
      %v368 = vmul.f32 %v299, %v344
      %v369 = vmul.f32 %v300, %v344
      %v370 = vmul.f32 %v301, %v344
      %v371 = vmul.f32 %v302, %v344
      %v372 = vmul.f32 %v303, %v344
      %v373 = vmul.f32 %v304, %v344
      %v374 = vmul.f32 %v305, %v344
      %v375 = vmul.f32 %v306, %v344
      %v376 = vmul.f32 %v307, %v344
      %v377 = vmul.f32 %v308, %v344
      %v378 = vmul.f32 %v309, %v344
      %v379 = vmul.f32 %v310, %v344
      %v380 = vmul.f32 %v311, %v344
      %v381 = vmul.f32 %v312, %v344
      %v382 = vmul.f32 %v313, %v344
      %v383 = vmul.f32 %v314, %v344
      %v384 = vmul.f32 %v315, %v344
      %v385 = vmul.f32 %v316, %v344
      %v386 = vmul.f32 %v317, %v344
      %v387 = vmul.f32 %v318, %v344
      %v388 = vmul.f32 %v319, %v344
      %v389 = vmul.f32 %v320, %v344
      %v390 = vmul.f32 %v321, %v344
      %v391 = vmul.f32 %v322, %v344
      %v392 = vmul.f32 %v323, %v344
      %v393 = vmul.f32 %v324, %v344
      %v394 = vmul.f32 %v325, %v344
      %v395 = vmul.f32 %v326, %v344
      %v396 = vmul.f32 %v327, %v344
      %v397 = vmul.f32 %v328, %v344
      %v398 = vmul.f32 %v329, %v344
      %v399 = vmul.f32 %v330, %v344
      %v400 = vmul.f32 %v331, %v344
      %v401 = vmul.f32 %v332, %v344
      %v402 = vmul.f32 %v333, %v344
      %v403 = vmul.f32 %v334, %v344
      %v404 = vmul.f32 %v335, %v344
      %v405 = vmul.f32 %v336, %v344
      %v406 = vmul.f32 %v337, %v344
      %v407 = vmul.f32 %v338, %v344
      %v408 = vmul.f32 %v339, %v344
      %v409 = vld [vmem:[%s1 + $0x1] sm:$0x1]
      %v410 = vlaneseq
      %v411 = vshrl.u32 %v410, 7
      %v412 = vsub.s32 0, %v411
      %v413 = vrot.slane %v409, %v412
      %v414 = vadd.f32 %v345, %v413
      %v415 = vadd.f32 %v346, %v413
      %v416 = vadd.f32 %v347, %v413
      %v417 = vadd.f32 %v348, %v413
      %v418 = vadd.f32 %v349, %v413
      %v419 = vadd.f32 %v350, %v413
      %v420 = vadd.f32 %v351, %v413
      %v421 = vadd.f32 %v352, %v413
      %v422 = vadd.f32 %v353, %v413
      %v423 = vadd.f32 %v354, %v413
      %v424 = vadd.f32 %v355, %v413
      %v425 = vadd.f32 %v356, %v413
      %v426 = vadd.f32 %v357, %v413
      %v427 = vadd.f32 %v358, %v413
      %v428 = vadd.f32 %v359, %v413
      %v429 = vadd.f32 %v360, %v413
      %v430 = vadd.f32 %v361, %v413
      %v431 = vadd.f32 %v362, %v413
      %v432 = vadd.f32 %v363, %v413
      %v433 = vadd.f32 %v364, %v413
      %v434 = vadd.f32 %v365, %v413
      %v435 = vadd.f32 %v366, %v413
      %v436 = vadd.f32 %v367, %v413
      %v437 = vadd.f32 %v368, %v413
      %v438 = vadd.f32 %v369, %v413
      %v439 = vadd.f32 %v370, %v413
      %v440 = vadd.f32 %v371, %v413
      %v441 = vadd.f32 %v372, %v413
      %v442 = vadd.f32 %v373, %v413
      %v443 = vadd.f32 %v374, %v413
      %v444 = vadd.f32 %v375, %v413
      %v445 = vadd.f32 %v376, %v413
      %v446 = vadd.f32 %v377, %v413
      %v447 = vadd.f32 %v378, %v413
      %v448 = vadd.f32 %v379, %v413
      %v449 = vadd.f32 %v380, %v413
      %v450 = vadd.f32 %v381, %v413
      %v451 = vadd.f32 %v382, %v413
      %v452 = vadd.f32 %v383, %v413
      %v453 = vadd.f32 %v384, %v413
      %v454 = vadd.f32 %v385, %v413
      %v455 = vadd.f32 %v386, %v413
      %v456 = vadd.f32 %v387, %v413
      %v457 = vadd.f32 %v388, %v413
      %v458 = vadd.f32 %v389, %v413
      %v459 = vadd.f32 %v390, %v413
      %v460 = vadd.f32 %v391, %v413
      %v461 = vadd.f32 %v392, %v413
      %v462 = vadd.f32 %v393, %v413
      %v463 = vadd.f32 %v394, %v413
      %v464 = vadd.f32 %v395, %v413
      %v465 = vadd.f32 %v396, %v413
      %v466 = vadd.f32 %v397, %v413
      %v467 = vadd.f32 %v398, %v413
      %v468 = vadd.f32 %v399, %v413
      %v469 = vadd.f32 %v400, %v413
      %v470 = vadd.f32 %v401, %v413
      %v471 = vadd.f32 %v402, %v413
      %v472 = vadd.f32 %v403, %v413
      %v473 = vadd.f32 %v404, %v413
      %v474 = vadd.f32 %v405, %v413
      %v475 = vadd.f32 %v406, %v413
      %v476 = vadd.f32 %v407, %v413
      %v477 = vadd.f32 %v408, %v413
      %v478 = vmax.f32 %v414, 0.0
      %v479 = vmax.f32 %v415, 0.0
      %v480 = vmax.f32 %v416, 0.0
      %v481 = vmax.f32 %v417, 0.0
      %v482 = vmax.f32 %v418, 0.0
      %v483 = vmax.f32 %v419, 0.0
      %v484 = vmax.f32 %v420, 0.0
      %v485 = vmax.f32 %v421, 0.0
      %v486 = vmax.f32 %v422, 0.0
      %v487 = vmax.f32 %v423, 0.0
      %v488 = vmax.f32 %v424, 0.0
      %v489 = vmax.f32 %v425, 0.0
      %v490 = vmax.f32 %v426, 0.0
      %v491 = vmax.f32 %v427, 0.0
      %v492 = vmax.f32 %v428, 0.0
      %v493 = vmax.f32 %v429, 0.0
      %v494 = vmax.f32 %v430, 0.0
      %v495 = vmax.f32 %v431, 0.0
      %v496 = vmax.f32 %v432, 0.0
      %v497 = vmax.f32 %v433, 0.0
      %v498 = vmax.f32 %v434, 0.0
      %v499 = vmax.f32 %v435, 0.0
      %v500 = vmax.f32 %v436, 0.0
      %v501 = vmax.f32 %v437, 0.0
      %v502 = vmax.f32 %v438, 0.0
      %v503 = vmax.f32 %v439, 0.0
      %v504 = vmax.f32 %v440, 0.0
      %v505 = vmax.f32 %v441, 0.0
      %v506 = vmax.f32 %v442, 0.0
      %v507 = vmax.f32 %v443, 0.0
      %v508 = vmax.f32 %v444, 0.0
      %v509 = vmax.f32 %v445, 0.0
      %v510 = vmax.f32 %v446, 0.0
      %v511 = vmax.f32 %v447, 0.0
      %v512 = vmax.f32 %v448, 0.0
      %v513 = vmax.f32 %v449, 0.0
      %v514 = vmax.f32 %v450, 0.0
      %v515 = vmax.f32 %v451, 0.0
      %v516 = vmax.f32 %v452, 0.0
      %v517 = vmax.f32 %v453, 0.0
      %v518 = vmax.f32 %v454, 0.0
      %v519 = vmax.f32 %v455, 0.0
      %v520 = vmax.f32 %v456, 0.0
      %v521 = vmax.f32 %v457, 0.0
      %v522 = vmax.f32 %v458, 0.0
      %v523 = vmax.f32 %v459, 0.0
      %v524 = vmax.f32 %v460, 0.0
      %v525 = vmax.f32 %v461, 0.0
      %v526 = vmax.f32 %v462, 0.0
      %v527 = vmax.f32 %v463, 0.0
      %v528 = vmax.f32 %v464, 0.0
      %v529 = vmax.f32 %v465, 0.0
      %v530 = vmax.f32 %v466, 0.0
      %v531 = vmax.f32 %v467, 0.0
      %v532 = vmax.f32 %v468, 0.0
      %v533 = vmax.f32 %v469, 0.0
      %v534 = vmax.f32 %v470, 0.0
      %v535 = vmax.f32 %v471, 0.0
      %v536 = vmax.f32 %v472, 0.0
      %v537 = vmax.f32 %v473, 0.0
      %v538 = vmax.f32 %v474, 0.0
      %v539 = vmax.f32 %v475, 0.0
      %v540 = vmax.f32 %v476, 0.0
      %v541 = vmax.f32 %v477, 0.0
      %v542 = vpack.c.bf16 %v479, %v478
      %v543 = vpack.c.bf16 %v481, %v480
      %v544 = vpack.c.bf16 %v483, %v482
      %v545 = vpack.c.bf16 %v485, %v484
      %v546 = vpack.c.bf16 %v487, %v486
      %v547 = vpack.c.bf16 %v489, %v488
      %v548 = vpack.c.bf16 %v491, %v490
      %v549 = vpack.c.bf16 %v493, %v492
      %v550 = vpack.c.bf16 %v495, %v494
      %v551 = vpack.c.bf16 %v497, %v496
      %v552 = vpack.c.bf16 %v499, %v498
      %v553 = vpack.c.bf16 %v501, %v500
      %v554 = vpack.c.bf16 %v503, %v502
      %v555 = vpack.c.bf16 %v505, %v504
      %v556 = vpack.c.bf16 %v507, %v506
      %v557 = vpack.c.bf16 %v509, %v508
      %v558 = vpack.c.bf16 %v511, %v510
      %v559 = vpack.c.bf16 %v513, %v512
      %v560 = vpack.c.bf16 %v515, %v514
      %v561 = vpack.c.bf16 %v517, %v516
      %v562 = vpack.c.bf16 %v519, %v518
      %v563 = vpack.c.bf16 %v521, %v520
      %v564 = vpack.c.bf16 %v523, %v522
      %v565 = vpack.c.bf16 %v525, %v524
      %v566 = vpack.c.bf16 %v527, %v526
      %v567 = vpack.c.bf16 %v529, %v528
      %v568 = vpack.c.bf16 %v531, %v530
      %v569 = vpack.c.bf16 %v533, %v532
      %v570 = vpack.c.bf16 %v535, %v534
      %v571 = vpack.c.bf16 %v537, %v536
      %v572 = vpack.c.bf16 %v539, %v538
      %v573 = vpack.c.bf16 %v541, %v540
      %v574 = vld [vmem:[%s201] sm:$0xf]
      %vm575 = vcmask 64512
      %v577 = vsel %vm575, %v542, 0
      %v580 = vsel %vm575, %v543, 0
      %v583 = vsel %vm575, %v544, 0
      %v586 = vsel %vm575, %v545, 0
      %v589 = vsel %vm575, %v546, 0
      %v592 = vsel %vm575, %v547, 0
      %v595 = vsel %vm575, %v548, 0
      %v598 = vsel %vm575, %v549, 0
      %v601 = vsel %vm575, %v550, 0
      %v604 = vsel %vm575, %v551, 0
      %v607 = vsel %vm575, %v552, 0
      %v610 = vsel %vm575, %v553, 0
      %v613 = vsel %vm575, %v554, 0
      %v616 = vsel %vm575, %v555, 0
      %v619 = vsel %vm575, %v556, 0
      %v622 = vsel %vm575, %v557, 0
      %v625 = vsel %vm575, %v558, 0
      %v628 = vsel %vm575, %v559, 0
      %v631 = vsel %vm575, %v560, 0
      %v634 = vsel %vm575, %v561, 0
      %v637 = vsel %vm575, %v562, 0
      %v640 = vsel %vm575, %v563, 0
      %v643 = vsel %vm575, %v564, 0
      %v646 = vsel %vm575, %v565, 0
      %v649 = vsel %vm575, %v566, 0
      %v652 = vsel %vm575, %v567, 0
      %v655 = vsel %vm575, %v568, 0
      %v658 = vsel %vm575, %v569, 0
      %v661 = vsel %vm575, %v570, 0
      %v664 = vsel %vm575, %v571, 0
      %v667 = vsel %vm575, %v572, 0
      %v670 = vsel %vm575, %v573, 0
      %vm672 = vcmask 1043456
      %v674 = vsel %vm672, %v574, 0
      %676 = vmatprep.subr.bf16.mxu0 0
      %677 = vmatpush1.bf16.msra.mxu0 %v674
      %678 = vmatprep.subr.bf16.mxu0 0
      %679 = vmatpush1.bf16.msra.mxu0 0
      %680 = vmatprep.subr.bf16.mxu0 0
      %681 = vmatpush1.bf16.msra.mxu0 0
      %682 = vmatprep.subr.bf16.mxu0 0
      %683 = vmatpush1.bf16.msra.mxu0 0
      %684 = vmatprep.subr.bf16.mxu0 0
      %685 = vmatpush1.bf16.msra.mxu0 0
      %686 = vmatprep.subr.bf16.mxu0 0
      %687 = vmatpush1.bf16.msra.mxu0 0
      %688 = vmatprep.subr.bf16.mxu0 0
      %689 = vmatpush1.bf16.msra.mxu0 0
      %690 = vmatprep.subr.bf16.mxu0 0
      %691 = vmatpush1.bf16.msra.mxu0 0
      %692 = vmatprep.subr.bf16.mxu0 0
      %693 = vmatpush1.bf16.msra.mxu0 0
      %694 = vmatprep.subr.bf16.mxu0 0
      %695 = vmatpush1.bf16.msra.mxu0 0
      %696 = vmatprep.subr.bf16.mxu0 0
      %697 = vmatpush1.bf16.msra.mxu0 0
      %698 = vmatprep.subr.bf16.mxu0 0
      %699 = vmatpush1.bf16.msra.mxu0 0
      %700 = vmatprep.subr.bf16.mxu0 0
      %701 = vmatpush1.bf16.msra.mxu0 0
      %702 = vmatprep.subr.bf16.mxu0 0
      %703 = vmatpush1.bf16.msra.mxu0 0
      %704 = vmatprep.subr.bf16.mxu0 0
      %705 = vmatpush1.bf16.msra.mxu0 0
      %706 = vmatprep.subr.bf16.mxu0 0
      %707 = vmatpush1.bf16.msra.mxu0 0
      %708 = vmatprep.mubr.bf16.mxu0 0
      %709 = vmatmul.mubr.bf16.gmra.mrb[0].mxu0 %v577
      %v710 = vpop.f32.mrb[0].mxu0
      %v711 = vadd.f32 0.0, %v710
      %v712 = vpop.f32.mrb[0].mxu0
      %v713 = vpop.f32.mrb[0].mxu0
      %v714 = vadd.f32 0.0, %v713
      %v715 = vpop.f32.mrb[0].mxu0
      %716 = vmatprep.mubr.bf16.mxu0 0
      %717 = vmatmul.mubr.bf16.gmra.mrb[0].mxu0 %v580
      %v718 = vpop.f32.mrb[0].mxu0
      %v719 = vadd.f32 0.0, %v718
      %v720 = vpop.f32.mrb[0].mxu0
      %v721 = vpop.f32.mrb[0].mxu0
      %v722 = vadd.f32 0.0, %v721
      %v723 = vpop.f32.mrb[0].mxu0
      %724 = vmatprep.mubr.bf16.mxu0 0
      %725 = vmatmul.mubr.bf16.gmra.mrb[0].mxu0 %v583
      %v726 = vpop.f32.mrb[0].mxu0
      %v727 = vadd.f32 0.0, %v726
      %v728 = vpop.f32.mrb[0].mxu0
      %v729 = vpop.f32.mrb[0].mxu0
      %v730 = vadd.f32 0.0, %v729
      %v731 = vpop.f32.mrb[0].mxu0
      %732 = vmatprep.mubr.bf16.mxu0 0
      %733 = vmatmul.mubr.bf16.gmra.mrb[0].mxu0 %v586
      %v734 = vpop.f32.mrb[0].mxu0
      %v735 = vadd.f32 0.0, %v734
      %v736 = vpop.f32.mrb[0].mxu0
      %v737 = vpop.f32.mrb[0].mxu0
      %v738 = vadd.f32 0.0, %v737
      %v739 = vpop.f32.mrb[0].mxu0
      %740 = vmatprep.mubr.bf16.mxu0 0
      %741 = vmatmul.mubr.bf16.gmra.mrb[0].mxu0 %v589
      %v742 = vpop.f32.mrb[0].mxu0
      %v743 = vadd.f32 0.0, %v742
      %v744 = vpop.f32.mrb[0].mxu0
      %v745 = vpop.f32.mrb[0].mxu0
      %v746 = vadd.f32 0.0, %v745
      %v747 = vpop.f32.mrb[0].mxu0
      %748 = vmatprep.mubr.bf16.mxu0 0
      %749 = vmatmul.mubr.bf16.gmra.mrb[0].mxu0 %v592
      %v750 = vpop.f32.mrb[0].mxu0
      %v751 = vadd.f32 0.0, %v750
      %v752 = vpop.f32.mrb[0].mxu0
      %v753 = vpop.f32.mrb[0].mxu0
      %v754 = vadd.f32 0.0, %v753
      %v755 = vpop.f32.mrb[0].mxu0
      %756 = vmatprep.mubr.bf16.mxu0 0
      %757 = vmatmul.mubr.bf16.gmra.mrb[0].mxu0 %v595
      %v758 = vpop.f32.mrb[0].mxu0
      %v759 = vadd.f32 0.0, %v758
      %v760 = vpop.f32.mrb[0].mxu0
      %v761 = vpop.f32.mrb[0].mxu0
      %v762 = vadd.f32 0.0, %v761
      %v763 = vpop.f32.mrb[0].mxu0
      %764 = vmatprep.mubr.bf16.mxu0 0
      %765 = vmatmul.mubr.bf16.gmra.mrb[0].mxu0 %v598
      %v766 = vpop.f32.mrb[0].mxu0
      %v767 = vadd.f32 0.0, %v766
      %v768 = vpop.f32.mrb[0].mxu0
      %v769 = vpop.f32.mrb[0].mxu0
      %v770 = vadd.f32 0.0, %v769
      %v771 = vpop.f32.mrb[0].mxu0
      %772 = vmatprep.mubr.bf16.mxu0 0
      %773 = vmatmul.mubr.bf16.gmra.mrb[0].mxu0 %v601
      %v774 = vpop.f32.mrb[0].mxu0
      %v775 = vadd.f32 0.0, %v774
      %v776 = vpop.f32.mrb[0].mxu0
      %v777 = vpop.f32.mrb[0].mxu0
      %v778 = vadd.f32 0.0, %v777
      %v779 = vpop.f32.mrb[0].mxu0
      %780 = vmatprep.mubr.bf16.mxu0 0
      %781 = vmatmul.mubr.bf16.gmra.mrb[0].mxu0 %v604
      %v782 = vpop.f32.mrb[0].mxu0
      %v783 = vadd.f32 0.0, %v782
      %v784 = vpop.f32.mrb[0].mxu0
      %v785 = vpop.f32.mrb[0].mxu0
      %v786 = vadd.f32 0.0, %v785
      %v787 = vpop.f32.mrb[0].mxu0
      %788 = vmatprep.mubr.bf16.mxu0 0
      %789 = vmatmul.mubr.bf16.gmra.mrb[0].mxu0 %v607
      %v790 = vpop.f32.mrb[0].mxu0
      %v791 = vadd.f32 0.0, %v790
      %v792 = vpop.f32.mrb[0].mxu0
      %v793 = vpop.f32.mrb[0].mxu0
      %v794 = vadd.f32 0.0, %v793
      %v795 = vpop.f32.mrb[0].mxu0
      %796 = vmatprep.mubr.bf16.mxu0 0
      %797 = vmatmul.mubr.bf16.gmra.mrb[0].mxu0 %v610
      %v798 = vpop.f32.mrb[0].mxu0
      %v799 = vadd.f32 0.0, %v798
      %v800 = vpop.f32.mrb[0].mxu0
      %v801 = vpop.f32.mrb[0].mxu0
      %v802 = vadd.f32 0.0, %v801
      %v803 = vpop.f32.mrb[0].mxu0
      %804 = vmatprep.mubr.bf16.mxu0 0
      %805 = vmatmul.mubr.bf16.gmra.mrb[0].mxu0 %v613
      %v806 = vpop.f32.mrb[0].mxu0
      %v807 = vadd.f32 0.0, %v806
      %v808 = vpop.f32.mrb[0].mxu0
      %v809 = vpop.f32.mrb[0].mxu0
      %v810 = vadd.f32 0.0, %v809
      %v811 = vpop.f32.mrb[0].mxu0
      %812 = vmatprep.mubr.bf16.mxu0 0
      %813 = vmatmul.mubr.bf16.gmra.mrb[0].mxu0 %v616
      %v814 = vpop.f32.mrb[0].mxu0
      %v815 = vadd.f32 0.0, %v814
      %v816 = vpop.f32.mrb[0].mxu0
      %v817 = vpop.f32.mrb[0].mxu0
      %v818 = vadd.f32 0.0, %v817
      %v819 = vpop.f32.mrb[0].mxu0
      %820 = vmatprep.mubr.bf16.mxu0 0
      %821 = vmatmul.mubr.bf16.gmra.mrb[0].mxu0 %v619
      %v822 = vpop.f32.mrb[0].mxu0
      %v823 = vadd.f32 0.0, %v822
      %v824 = vpop.f32.mrb[0].mxu0
      %v825 = vpop.f32.mrb[0].mxu0
      %v826 = vadd.f32 0.0, %v825
      %v827 = vpop.f32.mrb[0].mxu0
      %828 = vmatprep.mubr.bf16.mxu0 0
      %829 = vmatmul.mubr.bf16.gmra.mrb[0].mxu0 %v622
      %v830 = vpop.f32.mrb[0].mxu0
      %v831 = vadd.f32 0.0, %v830
      %v832 = vpop.f32.mrb[0].mxu0
      %v833 = vpop.f32.mrb[0].mxu0
      %v834 = vadd.f32 0.0, %v833
      %v835 = vpop.f32.mrb[0].mxu0
      %836 = vmatprep.mubr.bf16.mxu0 0
      %837 = vmatmul.mubr.bf16.gmra.mrb[0].mxu0 %v625
      %v838 = vpop.f32.mrb[0].mxu0
      %v839 = vadd.f32 0.0, %v838
      %v840 = vpop.f32.mrb[0].mxu0
      %v841 = vpop.f32.mrb[0].mxu0
      %v842 = vadd.f32 0.0, %v841
      %v843 = vpop.f32.mrb[0].mxu0
      %844 = vmatprep.mubr.bf16.mxu0 0
      %845 = vmatmul.mubr.bf16.gmra.mrb[0].mxu0 %v628
      %v846 = vpop.f32.mrb[0].mxu0
      %v847 = vadd.f32 0.0, %v846
      %v848 = vpop.f32.mrb[0].mxu0
      %v849 = vpop.f32.mrb[0].mxu0
      %v850 = vadd.f32 0.0, %v849
      %v851 = vpop.f32.mrb[0].mxu0
      %852 = vmatprep.mubr.bf16.mxu0 0
      %853 = vmatmul.mubr.bf16.gmra.mrb[0].mxu0 %v631
      %v854 = vpop.f32.mrb[0].mxu0
      %v855 = vadd.f32 0.0, %v854
      %v856 = vpop.f32.mrb[0].mxu0
      %v857 = vpop.f32.mrb[0].mxu0
      %v858 = vadd.f32 0.0, %v857
      %v859 = vpop.f32.mrb[0].mxu0
      %860 = vmatprep.mubr.bf16.mxu0 0
      %861 = vmatmul.mubr.bf16.gmra.mrb[0].mxu0 %v634
      %v862 = vpop.f32.mrb[0].mxu0
      %v863 = vadd.f32 0.0, %v862
      %v864 = vpop.f32.mrb[0].mxu0
      %v865 = vpop.f32.mrb[0].mxu0
      %v866 = vadd.f32 0.0, %v865
      %v867 = vpop.f32.mrb[0].mxu0
      %868 = vmatprep.mubr.bf16.mxu0 0
      %869 = vmatmul.mubr.bf16.gmra.mrb[0].mxu0 %v637
      %v870 = vpop.f32.mrb[0].mxu0
      %v871 = vadd.f32 0.0, %v870
      %v872 = vpop.f32.mrb[0].mxu0
      %v873 = vpop.f32.mrb[0].mxu0
      %v874 = vadd.f32 0.0, %v873
      %v875 = vpop.f32.mrb[0].mxu0
      %876 = vmatprep.mubr.bf16.mxu0 0
      %877 = vmatmul.mubr.bf16.gmra.mrb[0].mxu0 %v640
      %v878 = vpop.f32.mrb[0].mxu0
      %v879 = vadd.f32 0.0, %v878
      %v880 = vpop.f32.mrb[0].mxu0
      %v881 = vpop.f32.mrb[0].mxu0
      %v882 = vadd.f32 0.0, %v881
      %v883 = vpop.f32.mrb[0].mxu0
      %884 = vmatprep.mubr.bf16.mxu0 0
      %885 = vmatmul.mubr.bf16.gmra.mrb[0].mxu0 %v643
      %v886 = vpop.f32.mrb[0].mxu0
      %v887 = vadd.f32 0.0, %v886
      %v888 = vpop.f32.mrb[0].mxu0
      %v889 = vpop.f32.mrb[0].mxu0
      %v890 = vadd.f32 0.0, %v889
      %v891 = vpop.f32.mrb[0].mxu0
      %892 = vmatprep.mubr.bf16.mxu0 0
      %893 = vmatmul.mubr.bf16.gmra.mrb[0].mxu0 %v646
      %v894 = vpop.f32.mrb[0].mxu0
      %v895 = vadd.f32 0.0, %v894
      %v896 = vpop.f32.mrb[0].mxu0
      %v897 = vpop.f32.mrb[0].mxu0
      %v898 = vadd.f32 0.0, %v897
      %v899 = vpop.f32.mrb[0].mxu0
      %900 = vmatprep.mubr.bf16.mxu0 0
      %901 = vmatmul.mubr.bf16.gmra.mrb[0].mxu0 %v649
      %v902 = vpop.f32.mrb[0].mxu0
      %v903 = vadd.f32 0.0, %v902
      %v904 = vpop.f32.mrb[0].mxu0
      %v905 = vpop.f32.mrb[0].mxu0
      %v906 = vadd.f32 0.0, %v905
      %v907 = vpop.f32.mrb[0].mxu0
      %908 = vmatprep.mubr.bf16.mxu0 0
      %909 = vmatmul.mubr.bf16.gmra.mrb[0].mxu0 %v652
      %v910 = vpop.f32.mrb[0].mxu0
      %v911 = vadd.f32 0.0, %v910
      %v912 = vpop.f32.mrb[0].mxu0
      %v913 = vpop.f32.mrb[0].mxu0
      %v914 = vadd.f32 0.0, %v913
      %v915 = vpop.f32.mrb[0].mxu0
      %916 = vmatprep.mubr.bf16.mxu0 0
      %917 = vmatmul.mubr.bf16.gmra.mrb[0].mxu0 %v655
      %v918 = vpop.f32.mrb[0].mxu0
      %v919 = vadd.f32 0.0, %v918
      %v920 = vpop.f32.mrb[0].mxu0
      %v921 = vpop.f32.mrb[0].mxu0
      %v922 = vadd.f32 0.0, %v921
      %v923 = vpop.f32.mrb[0].mxu0
      %924 = vmatprep.mubr.bf16.mxu0 0
      %925 = vmatmul.mubr.bf16.gmra.mrb[0].mxu0 %v658
      %v926 = vpop.f32.mrb[0].mxu0
      %v927 = vadd.f32 0.0, %v926
      %v928 = vpop.f32.mrb[0].mxu0
      %v929 = vpop.f32.mrb[0].mxu0
      %v930 = vadd.f32 0.0, %v929
      %v931 = vpop.f32.mrb[0].mxu0
      %932 = vmatprep.mubr.bf16.mxu0 0
      %933 = vmatmul.mubr.bf16.gmra.mrb[0].mxu0 %v661
      %v934 = vpop.f32.mrb[0].mxu0
      %v935 = vadd.f32 0.0, %v934
      %v936 = vpop.f32.mrb[0].mxu0
      %v937 = vpop.f32.mrb[0].mxu0
      %v938 = vadd.f32 0.0, %v937
      %v939 = vpop.f32.mrb[0].mxu0
      %940 = vmatprep.mubr.bf16.mxu0 0
      %941 = vmatmul.mubr.bf16.gmra.mrb[0].mxu0 %v664
      %v942 = vpop.f32.mrb[0].mxu0
      %v943 = vadd.f32 0.0, %v942
      %v944 = vpop.f32.mrb[0].mxu0
      %v945 = vpop.f32.mrb[0].mxu0
      %v946 = vadd.f32 0.0, %v945
      %v947 = vpop.f32.mrb[0].mxu0
      %948 = vmatprep.mubr.bf16.mxu0 0
      %949 = vmatmul.mubr.bf16.gmra.mrb[0].mxu0 %v667
      %v950 = vpop.f32.mrb[0].mxu0
      %v951 = vadd.f32 0.0, %v950
      %v952 = vpop.f32.mrb[0].mxu0
      %v953 = vpop.f32.mrb[0].mxu0
      %v954 = vadd.f32 0.0, %v953
      %v955 = vpop.f32.mrb[0].mxu0
      %956 = vmatprep.mubr.bf16.mxu0 0
      %957 = vmatmul.mubr.bf16.gmra.mrb[0].mxu0 %v670
      %v958 = vpop.f32.mrb[0].mxu0
      %v959 = vadd.f32 0.0, %v958
      %v960 = vpop.f32.mrb[0].mxu0
      %v961 = vpop.f32.mrb[0].mxu0
      %v962 = vadd.f32 0.0, %v961
      %v963 = vpop.f32.mrb[0].mxu0
      %964 = vdwg.mxu0
      %v965 = vpack.c.bf16 %v714, %v711
      %v966 = vpack.c.bf16 %v722, %v719
      %v967 = vpack.c.bf16 %v730, %v727
      %v968 = vpack.c.bf16 %v738, %v735
      %v969 = vpack.c.bf16 %v746, %v743
      %v970 = vpack.c.bf16 %v754, %v751
      %v971 = vpack.c.bf16 %v762, %v759
      %v972 = vpack.c.bf16 %v770, %v767
      %v973 = vpack.c.bf16 %v778, %v775
      %v974 = vpack.c.bf16 %v786, %v783
      %v975 = vpack.c.bf16 %v794, %v791
      %v976 = vpack.c.bf16 %v802, %v799
      %v977 = vpack.c.bf16 %v810, %v807
      %v978 = vpack.c.bf16 %v818, %v815
      %v979 = vpack.c.bf16 %v826, %v823
      %v980 = vpack.c.bf16 %v834, %v831
      %v981 = vpack.c.bf16 %v842, %v839
      %v982 = vpack.c.bf16 %v850, %v847
      %v983 = vpack.c.bf16 %v858, %v855
      %v984 = vpack.c.bf16 %v866, %v863
      %v985 = vpack.c.bf16 %v874, %v871
      %v986 = vpack.c.bf16 %v882, %v879
      %v987 = vpack.c.bf16 %v890, %v887
      %v988 = vpack.c.bf16 %v898, %v895
      %v989 = vpack.c.bf16 %v906, %v903
      %v990 = vpack.c.bf16 %v914, %v911
      %v991 = vpack.c.bf16 %v922, %v919
      %v992 = vpack.c.bf16 %v930, %v927
      %v993 = vpack.c.bf16 %v938, %v935
      %v994 = vpack.c.bf16 %v946, %v943
      %v995 = vpack.c.bf16 %v954, %v951
      %v996 = vpack.c.bf16 %v962, %v959
      %v1029 = vunpack.c.l.b16 %v965
      %v1030 = vunpack.c.h.b16 %v965
      %v1031 = vunpack.c.l.b16 %v966
      %v1032 = vunpack.c.h.b16 %v966
      %v1033 = vunpack.c.l.b16 %v967
      %v1034 = vunpack.c.h.b16 %v967
      %v1035 = vunpack.c.l.b16 %v968
      %v1036 = vunpack.c.h.b16 %v968
      %v1037 = vunpack.c.l.b16 %v969
      %v1038 = vunpack.c.h.b16 %v969
      %v1039 = vunpack.c.l.b16 %v970
      %v1040 = vunpack.c.h.b16 %v970
      %v1041 = vunpack.c.l.b16 %v971
      %v1042 = vunpack.c.h.b16 %v971
      %v1043 = vunpack.c.l.b16 %v972
      %v1044 = vunpack.c.h.b16 %v972
      %v1045 = vunpack.c.l.b16 %v973
      %v1046 = vunpack.c.h.b16 %v973
      %v1047 = vunpack.c.l.b16 %v974
      %v1048 = vunpack.c.h.b16 %v974
      %v1049 = vunpack.c.l.b16 %v975
      %v1050 = vunpack.c.h.b16 %v975
      %v1051 = vunpack.c.l.b16 %v976
      %v1052 = vunpack.c.h.b16 %v976
      %v1053 = vunpack.c.l.b16 %v977
      %v1054 = vunpack.c.h.b16 %v977
      %v1055 = vunpack.c.l.b16 %v978
      %v1056 = vunpack.c.h.b16 %v978
      %v1057 = vunpack.c.l.b16 %v979
      %v1058 = vunpack.c.h.b16 %v979
      %v1059 = vunpack.c.l.b16 %v980
      %v1060 = vunpack.c.h.b16 %v980
      %v1061 = vunpack.c.l.b16 %v981
      %v1062 = vunpack.c.h.b16 %v981
      %v1063 = vunpack.c.l.b16 %v982
      %v1064 = vunpack.c.h.b16 %v982
      %v1065 = vunpack.c.l.b16 %v983
      %v1066 = vunpack.c.h.b16 %v983
      %v1067 = vunpack.c.l.b16 %v984
      %v1068 = vunpack.c.h.b16 %v984
      %v1069 = vunpack.c.l.b16 %v985
      %v1070 = vunpack.c.h.b16 %v985
      %v1071 = vunpack.c.l.b16 %v986
      %v1072 = vunpack.c.h.b16 %v986
      %v1073 = vunpack.c.l.b16 %v987
      %v1074 = vunpack.c.h.b16 %v987
      %v1075 = vunpack.c.l.b16 %v988
      %v1076 = vunpack.c.h.b16 %v988
      %v1077 = vunpack.c.l.b16 %v989
      %v1078 = vunpack.c.h.b16 %v989
      %v1079 = vunpack.c.l.b16 %v990
      %v1080 = vunpack.c.h.b16 %v990
      %v1081 = vunpack.c.l.b16 %v991
      %v1082 = vunpack.c.h.b16 %v991
      %v1083 = vunpack.c.l.b16 %v992
      %v1084 = vunpack.c.h.b16 %v992
      %v1085 = vunpack.c.l.b16 %v993
      %v1086 = vunpack.c.h.b16 %v993
      %v1087 = vunpack.c.l.b16 %v994
      %v1088 = vunpack.c.h.b16 %v994
      %v1089 = vunpack.c.l.b16 %v995
      %v1090 = vunpack.c.h.b16 %v995
      %v1091 = vunpack.c.l.b16 %v996
      %v1092 = vunpack.c.h.b16 %v996
      %v1093 = vpack.c.b16 %v1029, %v1029
      %v1094 = vpack.c.b16 %v1030, %v1030
      %v1095 = vpack.c.b16 %v1031, %v1031
      %v1096 = vpack.c.b16 %v1032, %v1032
      %v1097 = vpack.c.b16 %v1033, %v1033
      %v1098 = vpack.c.b16 %v1034, %v1034
      %v1099 = vpack.c.b16 %v1035, %v1035
      %v1100 = vpack.c.b16 %v1036, %v1036
      %v1101 = vpack.c.b16 %v1037, %v1037
      %v1102 = vpack.c.b16 %v1038, %v1038
      %v1103 = vpack.c.b16 %v1039, %v1039
      %v1104 = vpack.c.b16 %v1040, %v1040
      %v1105 = vpack.c.b16 %v1041, %v1041
      %v1106 = vpack.c.b16 %v1042, %v1042
      %v1107 = vpack.c.b16 %v1043, %v1043
      %v1108 = vpack.c.b16 %v1044, %v1044
      %v1109 = vpack.c.b16 %v1045, %v1045
      %v1110 = vpack.c.b16 %v1046, %v1046
      %v1111 = vpack.c.b16 %v1047, %v1047
      %v1112 = vpack.c.b16 %v1048, %v1048
      %v1113 = vpack.c.b16 %v1049, %v1049
      %v1114 = vpack.c.b16 %v1050, %v1050
      %v1115 = vpack.c.b16 %v1051, %v1051
      %v1116 = vpack.c.b16 %v1052, %v1052
      %v1117 = vpack.c.b16 %v1053, %v1053
      %v1118 = vpack.c.b16 %v1054, %v1054
      %v1119 = vpack.c.b16 %v1055, %v1055
      %v1120 = vpack.c.b16 %v1056, %v1056
      %v1121 = vpack.c.b16 %v1057, %v1057
      %v1122 = vpack.c.b16 %v1058, %v1058
      %v1123 = vpack.c.b16 %v1059, %v1059
      %v1124 = vpack.c.b16 %v1060, %v1060
      %v1125 = vpack.c.b16 %v1061, %v1061
      %v1126 = vpack.c.b16 %v1062, %v1062
      %v1127 = vpack.c.b16 %v1063, %v1063
      %v1128 = vpack.c.b16 %v1064, %v1064
      %v1129 = vpack.c.b16 %v1065, %v1065
      %v1130 = vpack.c.b16 %v1066, %v1066
      %v1131 = vpack.c.b16 %v1067, %v1067
      %v1132 = vpack.c.b16 %v1068, %v1068
      %v1133 = vpack.c.b16 %v1069, %v1069
      %v1134 = vpack.c.b16 %v1070, %v1070
      %v1135 = vpack.c.b16 %v1071, %v1071
      %v1136 = vpack.c.b16 %v1072, %v1072
      %v1137 = vpack.c.b16 %v1073, %v1073
      %v1138 = vpack.c.b16 %v1074, %v1074
      %v1139 = vpack.c.b16 %v1075, %v1075
      %v1140 = vpack.c.b16 %v1076, %v1076
      %v1141 = vpack.c.b16 %v1077, %v1077
      %v1142 = vpack.c.b16 %v1078, %v1078
      %v1143 = vpack.c.b16 %v1079, %v1079
      %v1144 = vpack.c.b16 %v1080, %v1080
      %v1145 = vpack.c.b16 %v1081, %v1081
      %v1146 = vpack.c.b16 %v1082, %v1082
      %v1147 = vpack.c.b16 %v1083, %v1083
      %v1148 = vpack.c.b16 %v1084, %v1084
      %v1149 = vpack.c.b16 %v1085, %v1085
      %v1150 = vpack.c.b16 %v1086, %v1086
      %v1151 = vpack.c.b16 %v1087, %v1087
      %v1152 = vpack.c.b16 %v1088, %v1088
      %v1153 = vpack.c.b16 %v1089, %v1089
      %v1154 = vpack.c.b16 %v1090, %v1090
      %v1155 = vpack.c.b16 %v1091, %v1091
      %v1156 = vpack.c.b16 %v1092, %v1092
      %1221 = vst [vmem:[%s209] sm:$0xf] %v1093
      %1222 = vst [vmem:[%s209 + $0x4] sm:$0xf] %v1094
      %1223 = vst [vmem:[%s209 + $0x8] sm:$0xf] %v1095
      %1224 = vst [vmem:[%s209 + $0xc] sm:$0xf] %v1096
      %1225 = vst [vmem:[%s209 + $0x10] sm:$0xf] %v1097
      %1226 = vst [vmem:[%s209 + $0x14] sm:$0xf] %v1098
      %1227 = vst [vmem:[%s209 + $0x18] sm:$0xf] %v1099
      %1228 = vst [vmem:[%s209 + $0x1c] sm:$0xf] %v1100
      %1229 = vst [vmem:[%s209 + $0x20] sm:$0xf] %v1101
      %1230 = vst [vmem:[%s209 + $0x24] sm:$0xf] %v1102
      %1231 = vst [vmem:[%s209 + $0x28] sm:$0xf] %v1103
      %1232 = vst [vmem:[%s209 + $0x2c] sm:$0xf] %v1104
      %1233 = vst [vmem:[%s209 + $0x30] sm:$0xf] %v1105
      %1234 = vst [vmem:[%s209 + $0x34] sm:$0xf] %v1106
      %1235 = vst [vmem:[%s209 + $0x38] sm:$0xf] %v1107
      %1236 = vst [vmem:[%s209 + $0x3c] sm:$0xf] %v1108
      %1237 = vst [vmem:[%s209 + $0x40] sm:$0xf] %v1109
      %1238 = vst [vmem:[%s209 + $0x44] sm:$0xf] %v1110
      %1239 = vst [vmem:[%s209 + $0x48] sm:$0xf] %v1111
      %1240 = vst [vmem:[%s209 + $0x4c] sm:$0xf] %v1112
      %1241 = vst [vmem:[%s209 + $0x50] sm:$0xf] %v1113
      %1242 = vst [vmem:[%s209 + $0x54] sm:$0xf] %v1114
      %1243 = vst [vmem:[%s209 + $0x58] sm:$0xf] %v1115
      %1244 = vst [vmem:[%s209 + $0x5c] sm:$0xf] %v1116
      %1245 = vst [vmem:[%s209 + $0x60] sm:$0xf] %v1117
      %1246 = vst [vmem:[%s209 + $0x64] sm:$0xf] %v1118
      %1247 = vst [vmem:[%s209 + $0x68] sm:$0xf] %v1119
      %1248 = vst [vmem:[%s209 + $0x6c] sm:$0xf] %v1120
      %1249 = vst [vmem:[%s209 + $0x70] sm:$0xf] %v1121
      %1250 = vst [vmem:[%s209 + $0x74] sm:$0xf] %v1122
      %1251 = vst [vmem:[%s209 + $0x78] sm:$0xf] %v1123
      %1252 = vst [vmem:[%s209 + $0x7c] sm:$0xf] %v1124
      %1253 = vst [vmem:[%s209 + $0x80] sm:$0xf] %v1125
      %1254 = vst [vmem:[%s209 + $0x84] sm:$0xf] %v1126
      %1255 = vst [vmem:[%s209 + $0x88] sm:$0xf] %v1127
      %1256 = vst [vmem:[%s209 + $0x8c] sm:$0xf] %v1128
      %1257 = vst [vmem:[%s209 + $0x90] sm:$0xf] %v1129
      %1258 = vst [vmem:[%s209 + $0x94] sm:$0xf] %v1130
      %1259 = vst [vmem:[%s209 + $0x98] sm:$0xf] %v1131
      %1260 = vst [vmem:[%s209 + $0x9c] sm:$0xf] %v1132
      %1261 = vst [vmem:[%s209 + $0xa0] sm:$0xf] %v1133
      %1262 = vst [vmem:[%s209 + $0xa4] sm:$0xf] %v1134
      %1263 = vst [vmem:[%s209 + $0xa8] sm:$0xf] %v1135
      %1264 = vst [vmem:[%s209 + $0xac] sm:$0xf] %v1136
      %1265 = vst [vmem:[%s209 + $0xb0] sm:$0xf] %v1137
      %1266 = vst [vmem:[%s209 + $0xb4] sm:$0xf] %v1138
      %1267 = vst [vmem:[%s209 + $0xb8] sm:$0xf] %v1139
      %1268 = vst [vmem:[%s209 + $0xbc] sm:$0xf] %v1140
      %1269 = vst [vmem:[%s209 + $0xc0] sm:$0xf] %v1141
      %1270 = vst [vmem:[%s209 + $0xc4] sm:$0xf] %v1142
      %1271 = vst [vmem:[%s209 + $0xc8] sm:$0xf] %v1143
      %1272 = vst [vmem:[%s209 + $0xcc] sm:$0xf] %v1144
      %1273 = vst [vmem:[%s209 + $0xd0] sm:$0xf] %v1145
      %1274 = vst [vmem:[%s209 + $0xd4] sm:$0xf] %v1146
      %1275 = vst [vmem:[%s209 + $0xd8] sm:$0xf] %v1147
      %1276 = vst [vmem:[%s209 + $0xdc] sm:$0xf] %v1148
      %1277 = vst [vmem:[%s209 + $0xe0] sm:$0xf] %v1149
      %1278 = vst [vmem:[%s209 + $0xe4] sm:$0xf] %v1150
      %1279 = vst [vmem:[%s209 + $0xe8] sm:$0xf] %v1151
      %1280 = vst [vmem:[%s209 + $0xec] sm:$0xf] %v1152
      %1281 = vst [vmem:[%s209 + $0xf0] sm:$0xf] %v1153
      %1282 = vst [vmem:[%s209 + $0xf4] sm:$0xf] %v1154
      %1283 = vst [vmem:[%s209 + $0xf8] sm:$0xf] %v1155
      %1284 = vst [vmem:[%s209 + $0xfc] sm:$0xf] %v1156
      %s1285 = smul.u32 64, %s18
      %p1286 = scmp.lt.s32.totalorder %s1285, 127
      %s1287 = scalar_select %p1286, %s1285, 127
      %p1288 = scmp.lt.s32.totalorder %s19, 0
      %s1289 = scalar_select %p1288, %s19, 0
      %s1290 = sadd.s32 %s1289, %s1287
      %s1291 = smul.addr %s1290, 4
      %s1292 = scalar_lea.vmem %s3, %s1291
      // Predicated region
      $region33: #{cnn_deconv_forward.4} parent=31 // pred_check
        %p1293 = pneg %p119
      $region34: #{cnn_deconv_forward.4} parent=31 // pred_check_branch
        %1295 = sbr.rel (%p1293) target = $region36
      $region35: #{cnn_deconv_forward.4} parent=31 // pred_region
        %s1296 = smul.u32 64, %s18
      $region36: #{cnn_deconv_forward.4} parent=31 // pred_fallthru
        _
    $region32: #{cnn_deconv_forward.4} parent=5 // pred_fallthru
      _
    %p1297 = scmp.le.s32.totalorder 2, %s9
    // Predicated region
    $region37: #{cnn_deconv_forward.4} parent=5 // pred_check
      %p1298 = pneg %p1297
    $region38: #{cnn_deconv_forward.4} parent=5 // pred_check_branch
      %1300 = sbr.rel (%p1298) target = $region40
    $region39: #{cnn_deconv_forward.4} parent=5 // pred_region
      %s1301 = ssub.s32 %s9, 2
      // Predicated region
      $region41: #{cnn_deconv_forward.4} parent=39 // pred_check
        %p1302 = pneg %p125
      $region42: #{cnn_deconv_forward.4} parent=39 // pred_check_branch
        %1304 = sbr.rel (%p1302) target = $region44
      $region43: #{cnn_deconv_forward.4} parent=39 // pred_region
        %s1305 = smul.u32 64, %s20
        %p1306 = scmp.lt.s32.totalorder %s1305, 127
        %s1307 = scalar_select %p1306, %s1305, 127
        %p1308 = scmp.lt.s32.totalorder %s21, 0
        %s1309 = scalar_select %p1308, %s21, 0
        %s1310 = sadd.s32 %s1309, %s1307
        %s1311 = smul.addr %s1310, 4
        %s1312 = scalar_lea.vmem %s3, %s1311
      $region44: #{cnn_deconv_forward.4} parent=39 // pred_fallthru
        _
    $region40: #{cnn_deconv_forward.4} parent=5 // pred_fallthru
      _
  $region6: #{cnn_deconv_forward.4} parent=0 // loop_footer
    %s13 = sadd.s32 1, %s9
  $region7: #{cnn_deconv_forward.4} parent=0 // loop_footer_branch
    %8 = sbr.rel target = $region3
  $region8: #{cnn_deconv_forward.4} parent=0 // loop_exit
    _

// kernel: tile.8
$region0: #{tile.8}
  #allocation0 [shape = 's32[1]{0}', space=sflag, size = 0x4, scoped, tag = 'scoped memory for tile.8']
  %s0 = inlined_call_operand.vmem [shape: f32[8], index: 0, kind: input, shape index: {}]
  %s1 = inlined_call_operand.vmem [shape: f32[32,8], index: 1, kind: output, shape index: {}]
  // Predicated region
  $region2: #{tile.8} parent=0 // pred_check
    _
  $region3: #{tile.8} parent=0 // pred_check_branch
    %3 = sbr.rel (0) target = $region5
  $region4: #{tile.8} parent=0 // pred_region
    _
  $region5: #{tile.8} parent=0 // pred_fallthru
    _
  %v4 = vld [vmem:[%s0] ss:$0 sm:$0xff]
  %5 = vst [vmem:[%s1] sm:$0xff] %v4
  %s6 = scalar_lea.vmem %s1, 8
  %7 = vst [vmem:[%s6] sm:$0xff] %v4
  %s8 = scalar_lea.vmem %s1, 16
  %9 = vst [vmem:[%s8] sm:$0xff] %v4
  %s10 = scalar_lea.vmem %s1, 24
  %11 = vst [vmem:[%s10] sm:$0xff] %v4

// kernel: tile.9
$region0: #{tile.9}
  %s0 = inlined_call_operand.vmem [shape: f32[32,8], index: 0, kind: input, shape index: {}]
  %s1 = inlined_call_operand.vmem [shape: f32[1,256], index: 1, kind: output, shape index: {}]
  $region1: #{tile.9} parent=0
    #allocation0 [shape = 'u8[8192]{0}', space=vmem, size = 0x2000, scoped, tag = 'scoped mem for output reshape']
    %s2 = smov 3
    %v3 = vld [vmem:[%s0] ss:$16 sm:%s2]
    %vm4 = vcmask 64512
    %5 = vst.msk [vmem:[#allocation0] ss:$8 sm:$0x3] %vm4, %v3
    %s6 = scalar_lea.vmem %s0, 15
    %s7 = smov 3
    %v8 = vld [vmem:[%s6] ss:$16 sm:%s7]
    %9 = vrot.lane.b32.xlu0 %v8, 120
    %v10 = vpop.permute.xlu0 %9
    %vm11 = vcmask 1048512
    %12 = vst.msk [vmem:[#allocation0] ss:$8 sm:$0x3] %vm11, %v10
    %s13 = scalar_lea.vmem %s0, 14
    %s14 = smov 3
    %v15 = vld [vmem:[%s13] ss:$16 sm:%s14]
    %16 = vrot.lane.b32.xlu0 %v15, 112
    %v17 = vpop.permute.xlu0 %16
    %vm18 = vcmask 982912
    %19 = vst.msk [vmem:[#allocation0] ss:$8 sm:$0x3] %vm18, %v17
    %s20 = scalar_lea.vmem %s0, 13
    %s21 = smov 3
    %v22 = vld [vmem:[%s20] ss:$16 sm:%s21]
    %23 = vrot.lane.b32.xlu0 %v22, 104
    %v24 = vpop.permute.xlu0 %23
    %vm25 = vcmask 917312
    %26 = vst.msk [vmem:[#allocation0] ss:$8 sm:$0x3] %vm25, %v24
    %s27 = scalar_lea.vmem %s0, 12
    %s28 = smov 3
    %v29 = vld [vmem:[%s27] ss:$16 sm:%s28]
    %30 = vrot.lane.b32.xlu0 %v29, 96
    %v31 = vpop.permute.xlu0 %30
    %vm32 = vcmask 851712
    %33 = vst.msk [vmem:[#allocation0] ss:$8 sm:$0x3] %vm32, %v31
    %s34 = scalar_lea.vmem %s0, 11
    %s35 = smov 3
    %v36 = vld [vmem:[%s34] ss:$16 sm:%s35]
    %37 = vrot.lane.b32.xlu0 %v36, 88
    %v38 = vpop.permute.xlu0 %37
    %vm39 = vcmask 786112
    %40 = vst.msk [vmem:[#allocation0] ss:$8 sm:$0x3] %vm39, %v38
    %s41 = scalar_lea.vmem %s0, 10
    %s42 = smov 3
    %v43 = vld [vmem:[%s41] ss:$16 sm:%s42]
    %44 = vrot.lane.b32.xlu0 %v43, 80
    %v45 = vpop.permute.xlu0 %44
    %vm46 = vcmask 720512
    %47 = vst.msk [vmem:[#allocation0] ss:$8 sm:$0x3] %vm46, %v45
    %s48 = scalar_lea.vmem %s0, 9
    %s49 = smov 3
    %v50 = vld [vmem:[%s48] ss:$16 sm:%s49]
    %51 = vrot.lane.b32.xlu0 %v50, 72
    %v52 = vpop.permute.xlu0 %51
    %vm53 = vcmask 654912
    %54 = vst.msk [vmem:[#allocation0] ss:$8 sm:$0x3] %vm53, %v52
    %s55 = scalar_lea.vmem %s0, 8
    %s56 = smov 3
    %v57 = vld [vmem:[%s55] ss:$16 sm:%s56]
    %58 = vrot.lane.b32.xlu0 %v57, 64
    %v59 = vpop.permute.xlu0 %58
    %vm60 = vcmask 589312
    %61 = vst.msk [vmem:[#allocation0] ss:$8 sm:$0x3] %vm60, %v59
    %s62 = scalar_lea.vmem %s0, 7
    %s63 = smov 3
    %v64 = vld [vmem:[%s62] ss:$16 sm:%s63]
    %65 = vrot.lane.b32.xlu0 %v64, 56
    %v66 = vpop.permute.xlu0 %65
    %vm67 = vcmask 523712
    %68 = vst.msk [vmem:[#allocation0] ss:$8 sm:$0x3] %vm67, %v66
    %s69 = scalar_lea.vmem %s0, 6
    %s70 = smov 3
    %v71 = vld [vmem:[%s69] ss:$16 sm:%s70]
    %72 = vrot.lane.b32.xlu0 %v71, 48
    %v73 = vpop.permute.xlu0 %72
    %vm74 = vcmask 458112
    %75 = vst.msk [vmem:[#allocation0] ss:$8 sm:$0x3] %vm74, %v73
    %s76 = scalar_lea.vmem %s0, 5
    %s77 = smov 3
    %v78 = vld [vmem:[%s76] ss:$16 sm:%s77]
    %79 = vrot.lane.b32.xlu0 %v78, 40
    %v80 = vpop.permute.xlu0 %79
    %vm81 = vcmask 392512
    %82 = vst.msk [vmem:[#allocation0] ss:$8 sm:$0x3] %vm81, %v80
    %s83 = scalar_lea.vmem %s0, 4
    %s84 = smov 3
    %v85 = vld [vmem:[%s83] ss:$16 sm:%s84]
    %86 = vrot.lane.b32.xlu0 %v85, 32
    %v87 = vpop.permute.xlu0 %86
    %vm88 = vcmask 326912
    %89 = vst.msk [vmem:[#allocation0] ss:$8 sm:$0x3] %vm88, %v87
    %s90 = scalar_lea.vmem %s0, 3
    %s91 = smov 3
    %v92 = vld [vmem:[%s90] ss:$16 sm:%s91]
    %93 = vrot.lane.b32.xlu0 %v92, 24
    %v94 = vpop.permute.xlu0 %93
    %vm95 = vcmask 261312
    %96 = vst.msk [vmem:[#allocation0] ss:$8 sm:$0x3] %vm95, %v94
    %s97 = scalar_lea.vmem %s0, 2
    %s98 = smov 3
    %v99 = vld [vmem:[%s97] ss:$16 sm:%s98]
    %100 = vrot.lane.b32.xlu0 %v99, 16
    %v101 = vpop.permute.xlu0 %100
    %vm102 = vcmask 195712
    %103 = vst.msk [vmem:[#allocation0] ss:$8 sm:$0x3] %vm102, %v101
    %s104 = scalar_lea.vmem %s0, 1
    %s105 = smov 3
    %v106 = vld [vmem:[%s104] ss:$16 sm:%s105]
    %107 = vrot.lane.b32.xlu0 %v106, 8
    %v108 = vpop.permute.xlu0 %107
    %vm109 = vcmask 130112
    %110 = vst.msk [vmem:[#allocation0] ss:$8 sm:$0x3] %vm109, %v108
    %s112 = sshllo.u32 0, 1
    %v114 = vld [vmem:[#allocation0] sm:%s112]
    %s115 = sshllo.u32 0, 1
    %116 = vst [vmem:[%s1] sm:%s115] %v114
    %s117 = scalar_lea.vmem [#allocation0], 8
    %v118 = vld [vmem:[%s117] sm:%s112]
    %s119 = sshllo.u32 0, 1
    %s120 = scalar_lea.vmem %s1, 1
    %121 = vst [vmem:[%s120] sm:%s119] %v118

// kernel: cnn_deconv_forward.5
$region0: #{cnn_deconv_forward.5}
  #allocation0 [shape = 'u32[]', space=smem, size = 0x4, offset = 0x4, fixed_abs, tag = 'smem constant byte address 0x4 - core index']
  #allocation1 [shape = 'u32[144,128]{1,0:T(1,128)}', space=vmem, size = 0x12000, scoped, tag = 'internal scratch']
  %s0 = inlined_call_operand.vmem [shape: f32[128,256], index: 0, kind: input, shape index: {}]
  %s1 = inlined_call_operand.vmem [shape: f32[1,256], index: 1, kind: input, shape index: {}]
  %s2 = inlined_call_operand.vmem [shape: f32[128,256], index: 2, kind: output, shape index: {}]
  %s3 = sld [smem:[#allocation0]]
  $region41: #{cnn_deconv_forward.5} parent=0
    _
  %s5 = ssub.s32 1, %s3
  %s6 = scalar_select 0, %s5, %s3
  loop: start=0, step=1, limit=4
  $region2: #{cnn_deconv_forward.5} parent=0 // loop_pre_header
    _
  $region3: #{cnn_deconv_forward.5} parent=0 // loop_header
    %s8 = sphi 0, %s12
    %p9 = scmp.ge.s32.totalorder %s8, 4
    %s18 = sphi 0, %s20
    %s21 = sphi 0, %s18
    %s22 = sphi 0, %s21
    %s38 = sphi 0, %s22
    %s42 = sphi 0, %s42
    %s44 = sphi 0, %s42
    %s45 = sphi 0, %s44
    %s59 = sphi 0, %s45
    %s65 = sphi 0, %s67
    %s68 = sphi 0, %s65
    %s69 = sphi 0, %s68
    %s85 = sphi 0, %s69
  $region4: #{cnn_deconv_forward.5} parent=0 // loop_header_branch
    %11 = sbr.rel (%p9) target = $region8
  $region5: #{cnn_deconv_forward.5} parent=0 // loop_body
    %s13 = ssub.s32 %s8, 1
    %s14 = ssub.s32 %s8, 2
    %s15 = sadd.s32 %s8, 1
    %s16 = ssub.s32 %s8, %s15
    %p17 = scmp.eq.s32.totalorder %s16, 0
    %s19 = sadd.s32 %s18, 1
    %s20 = scalar_select %p17, %s18, %s19
    %p23 = pneg %p17
    %p24 = scmp.eq.s32.totalorder %s8, 1
    %p25 = por %p23, %p24
    %p26 = scmp.ne.s32.totalorder %s18, %s21
    %p27 = scmp.eq.s32.totalorder %s8, 0
    %p28 = por %p26, %p27
    %p29 = scmp.ne.s32.totalorder %s18, %s21
    %p30 = scmp.eq.s32.totalorder %s13, 1
    %p31 = por %p29, %p30
    %p32 = scmp.ne.s32.totalorder %s21, %s22
    %p33 = scmp.eq.s32.totalorder %s13, 0
    %p34 = por %p32, %p33
    %p35 = scmp.ne.s32.totalorder %s21, %s22
    %p36 = scmp.eq.s32.totalorder %s14, 1
    %p37 = por %p35, %p36
    %p39 = scmp.ne.s32.totalorder %s22, %s38
    %p40 = scmp.eq.s32.totalorder %s14, 0
    %p41 = por %p39, %p40
    %s43 = sadd.s32 %s42, 1
    %p46 = scmp.eq.s32.totalorder %s8, 1
    %p47 = scmp.ne.s32.totalorder %s42, %s44
    %p48 = scmp.eq.s32.totalorder %s8, 0
    %p49 = por %p47, %p48
    %p50 = scmp.ne.s32.totalorder %s42, %s44
    %p51 = scmp.eq.s32.totalorder %s13, 1
    %p52 = por %p50, %p51
    %p53 = scmp.ne.s32.totalorder %s44, %s45
    %p54 = scmp.eq.s32.totalorder %s13, 0
    %p55 = por %p53, %p54
    %p56 = scmp.ne.s32.totalorder %s44, %s45
    %p57 = scmp.eq.s32.totalorder %s14, 1
    %p58 = por %p56, %p57
    %p60 = scmp.ne.s32.totalorder %s45, %s59
    %p61 = scmp.eq.s32.totalorder %s14, 0
    %p62 = por %p60, %p61
    %s63 = ssub.s32 %s8, %s15
    %p64 = scmp.eq.s32.totalorder %s63, 0
    %s66 = sadd.s32 %s65, 1
    %s67 = scalar_select %p64, %s65, %s66
    %p70 = pneg %p64
    %p71 = scmp.eq.s32.totalorder %s8, 1
    %p72 = por %p70, %p71
    %p73 = scmp.ne.s32.totalorder %s65, %s68
    %p74 = scmp.eq.s32.totalorder %s8, 0
    %p75 = por %p73, %p74
    %p76 = scmp.ne.s32.totalorder %s65, %s68
    %p77 = scmp.eq.s32.totalorder %s13, 1
    %p78 = por %p76, %p77
    %p79 = scmp.ne.s32.totalorder %s68, %s69
    %p80 = scmp.eq.s32.totalorder %s13, 0
    %p81 = por %p79, %p80
    %p82 = scmp.ne.s32.totalorder %s68, %s69
    %p83 = scmp.eq.s32.totalorder %s14, 1
    %p84 = por %p82, %p83
    %p86 = scmp.ne.s32.totalorder %s69, %s85
    %p87 = scmp.eq.s32.totalorder %s14, 0
    %p88 = por %p86, %p87
    %p89 = scmp.le.s32.totalorder 1, %s8
    %p90 = scmp.lt.s32.totalorder %s8, 3
    %p91 = pnand %p89, %p90
    %p92 = pneg %p91
    // Predicated region
    $region9: #{cnn_deconv_forward.5} parent=5 // pred_check
      _
    $region10: #{cnn_deconv_forward.5} parent=5 // pred_check_branch
      %94 = sbr.rel (%p91) target = $region12
    $region11: #{cnn_deconv_forward.5} parent=5 // pred_region
      %s95 = ssub.s32 %s8, 1
      // Predicated region
      $region13: #{cnn_deconv_forward.5} parent=11 // pred_check
        %p96 = pneg %p55
      $region14: #{cnn_deconv_forward.5} parent=11 // pred_check_branch
        %98 = sbr.rel (%p96) target = $region16
      $region15: #{cnn_deconv_forward.5} parent=11 // pred_region
        _
      $region16: #{cnn_deconv_forward.5} parent=11 // pred_fallthru
        _
    $region12: #{cnn_deconv_forward.5} parent=5 // pred_fallthru
      _
    %p99 = scmp.lt.s32.totalorder %s8, 2
    // Predicated region
    $region17: #{cnn_deconv_forward.5} parent=5 // pred_check
      %p100 = pneg %p99
    $region18: #{cnn_deconv_forward.5} parent=5 // pred_check_branch
      %102 = sbr.rel (%p100) target = $region20
    $region19: #{cnn_deconv_forward.5} parent=5 // pred_region
      // Predicated region
      $region21: #{cnn_deconv_forward.5} parent=19 // pred_check
        %p103 = pneg %p28
      $region22: #{cnn_deconv_forward.5} parent=19 // pred_check_branch
        %105 = sbr.rel (%p103) target = $region24
      $region23: #{cnn_deconv_forward.5} parent=19 // pred_region
        %s106 = smul.u32 8, %s8
        %p107 = scmp.lt.s32.totalorder %s106, 15
        %s108 = scalar_select %p107, %s106, 15
        %s109 = smul.addr %s108, 2
        %s110 = smul.addr %s109, 8
        %s111 = scalar_lea.vmem %s0, %s110
        %s112 = smul.u32 8, %s8
      $region24: #{cnn_deconv_forward.5} parent=19 // pred_fallthru
        _
    $region20: #{cnn_deconv_forward.5} parent=5 // pred_fallthru
      _
    %p113 = scmp.le.s32.totalorder 1, %s8
    %p114 = scmp.lt.s32.totalorder %s8, 3
    %p115 = pnand %p113, %p114
    %p116 = pneg %p115
    // Predicated region
    $region25: #{cnn_deconv_forward.5} parent=5 // pred_check
      _
    $region26: #{cnn_deconv_forward.5} parent=5 // pred_check_branch
      %118 = sbr.rel (%p115) target = $region28
    $region27: #{cnn_deconv_forward.5} parent=5 // pred_region
      %s119 = ssub.s32 %s8, 1
      %s120 = smul.u32 8, %s13
      %p121 = scmp.lt.s32.totalorder %s120, 15
      %s122 = scalar_select %p121, %s120, 15
      %s123 = smul.addr %s122, 2
      %s124 = smul.addr %s123, 8
      %s125 = scalar_lea.vmem %s0, %s124
      %p126 = pneg %p34
      %p127 = pneg %p31
      %p128 = pneg %p55
      %p129 = pneg %p52
      %p130 = pneg %p81
      %p131 = pneg %p78
      %s132 = smul.u32 8, %s13
      %p133 = scmp.lt.s32.totalorder %s132, 15
      %s134 = scalar_select %p133, %s132, 15
      %s135 = smul.addr %s134, 2
      %s136 = smul.addr %s135, 8
      %s137 = scalar_lea.vmem %s2, %s136
      %s138 = smul.u32 8, %s13
      %p139 = scmp.lt.s32.totalorder %s138, 15
      %s140 = scalar_select %p139, %s138, 15
      %s141 = smul.addr %s140, 2
      %s142 = smul.addr %s141, 8
      %s143 = scalar_lea.vmem %s0, %s142
      %s144 = smul.u32 8, %s13
      %s145 = smul.u32 8, %s13
      %p146 = scmp.lt.s32.totalorder %s145, 15
      %s147 = scalar_select %p146, %s145, 15
      %s148 = smul.addr %s147, 2
      %s149 = smul.addr %s148, 8
      %s150 = scalar_lea.vmem %s2, %s149
      %s151 = smul.u32 8, %s13
      %v152 = vld [vmem:[%s143] sm:$0xff]
      %v153 = vld [vmem:[%s143 + $0x8] sm:$0xff]
      %v154 = vld [vmem:[%s143 + $0x10] sm:$0xff]
      %v155 = vld [vmem:[%s143 + $0x18] sm:$0xff]
      %v156 = vld [vmem:[%s143 + $0x20] sm:$0xff]
      %v157 = vld [vmem:[%s143 + $0x28] sm:$0xff]
      %v158 = vld [vmem:[%s143 + $0x30] sm:$0xff]
      %v159 = vld [vmem:[%s143 + $0x38] sm:$0xff]
      %v160 = vld [vmem:[%s143 + $0x40] sm:$0xff]
      %v161 = vld [vmem:[%s143 + $0x48] sm:$0xff]
      %v162 = vld [vmem:[%s143 + $0x50] sm:$0xff]
      %v163 = vld [vmem:[%s143 + $0x58] sm:$0xff]
      %v164 = vld [vmem:[%s143 + $0x60] sm:$0xff]
      %v165 = vld [vmem:[%s143 + $0x68] sm:$0xff]
      %v166 = vld [vmem:[%s143 + $0x70] sm:$0xff]
      %v167 = vld [vmem:[%s143 + $0x78] sm:$0xff]
      %v168 = vld [vmem:[%s1] sm:$0x3]
      %v170 = vlaneseq
      %v171 = vshrl.u32 %v170, 7
      %v172 = vsub.s32 0, %v171
      %v173 = vrot.slane %v168, %v172
      %v174 = vlaneseq
      %v175 = vshrl.u32 %v174, 7
      %v176 = vsub.s32 1, %v175
      %v177 = vrot.slane %v168, %v176
      %v180 = vadd.f32 %v152, %v173
      %v181 = vadd.f32 %v153, %v177
      %v182 = vadd.f32 %v154, %v173
      %v183 = vadd.f32 %v155, %v177
      %v184 = vadd.f32 %v156, %v173
      %v185 = vadd.f32 %v157, %v177
      %v186 = vadd.f32 %v158, %v173
      %v187 = vadd.f32 %v159, %v177
      %v188 = vadd.f32 %v160, %v173
      %v189 = vadd.f32 %v161, %v177
      %v190 = vadd.f32 %v162, %v173
      %v191 = vadd.f32 %v163, %v177
      %v192 = vadd.f32 %v164, %v173
      %v193 = vadd.f32 %v165, %v177
      %v194 = vadd.f32 %v166, %v173
      %v195 = vadd.f32 %v167, %v177
      %v196 = vtanh.pop %v180
      %v197 = vtanh.pop %v181
      %v198 = vtanh.pop %v182
      %v199 = vtanh.pop %v183
      %v200 = vtanh.pop %v184
      %v201 = vtanh.pop %v185
      %v202 = vtanh.pop %v186
      %v203 = vtanh.pop %v187
      %v204 = vtanh.pop %v188
      %v205 = vtanh.pop %v189
      %v206 = vtanh.pop %v190
      %v207 = vtanh.pop %v191
      %v208 = vtanh.pop %v192
      %v209 = vtanh.pop %v193
      %v210 = vtanh.pop %v194
      %v211 = vtanh.pop %v195
      %212 = vst [vmem:[%s150] sm:$0xff] %v196
      %213 = vst [vmem:[%s150 + $0x8] sm:$0xff] %v197
      %214 = vst [vmem:[%s150 + $0x10] sm:$0xff] %v198
      %215 = vst [vmem:[%s150 + $0x18] sm:$0xff] %v199
      %216 = vst [vmem:[%s150 + $0x20] sm:$0xff] %v200
      %217 = vst [vmem:[%s150 + $0x28] sm:$0xff] %v201
      %218 = vst [vmem:[%s150 + $0x30] sm:$0xff] %v202
      %219 = vst [vmem:[%s150 + $0x38] sm:$0xff] %v203
      %220 = vst [vmem:[%s150 + $0x40] sm:$0xff] %v204
      %221 = vst [vmem:[%s150 + $0x48] sm:$0xff] %v205
      %222 = vst [vmem:[%s150 + $0x50] sm:$0xff] %v206
      %223 = vst [vmem:[%s150 + $0x58] sm:$0xff] %v207
      %224 = vst [vmem:[%s150 + $0x60] sm:$0xff] %v208
      %225 = vst [vmem:[%s150 + $0x68] sm:$0xff] %v209
      %226 = vst [vmem:[%s150 + $0x70] sm:$0xff] %v210
      %227 = vst [vmem:[%s150 + $0x78] sm:$0xff] %v211
      %s228 = smul.u32 8, %s13
      %p229 = scmp.lt.s32.totalorder %s228, 15
      %s230 = scalar_select %p229, %s228, 15
      %s231 = smul.addr %s230, 2
      %s232 = smul.addr %s231, 8
      %s233 = scalar_lea.vmem %s2, %s232
      // Predicated region
      $region29: #{cnn_deconv_forward.5} parent=27 // pred_check
        %p234 = pneg %p78
      $region30: #{cnn_deconv_forward.5} parent=27 // pred_check_branch
        %236 = sbr.rel (%p234) target = $region32
      $region31: #{cnn_deconv_forward.5} parent=27 // pred_region
        %s237 = smul.u32 8, %s13
      $region32: #{cnn_deconv_forward.5} parent=27 // pred_fallthru
        _
    $region28: #{cnn_deconv_forward.5} parent=5 // pred_fallthru
      _
    %p238 = scmp.le.s32.totalorder 2, %s8
    // Predicated region
    $region33: #{cnn_deconv_forward.5} parent=5 // pred_check
      %p239 = pneg %p238
    $region34: #{cnn_deconv_forward.5} parent=5 // pred_check_branch
      %241 = sbr.rel (%p239) target = $region36
    $region35: #{cnn_deconv_forward.5} parent=5 // pred_region
      %s242 = ssub.s32 %s8, 2
      // Predicated region
      $region37: #{cnn_deconv_forward.5} parent=35 // pred_check
        %p243 = pneg %p84
      $region38: #{cnn_deconv_forward.5} parent=35 // pred_check_branch
        %245 = sbr.rel (%p243) target = $region40
      $region39: #{cnn_deconv_forward.5} parent=35 // pred_region
        %s246 = smul.u32 8, %s14
        %p247 = scmp.lt.s32.totalorder %s246, 15
        %s248 = scalar_select %p247, %s246, 15
        %s249 = smul.addr %s248, 2
        %s250 = smul.addr %s249, 8
        %s251 = scalar_lea.vmem %s2, %s250
      $region40: #{cnn_deconv_forward.5} parent=35 // pred_fallthru
        _
    $region36: #{cnn_deconv_forward.5} parent=5 // pred_fallthru
      _
  $region6: #{cnn_deconv_forward.5} parent=0 // loop_footer
    %s12 = sadd.s32 1, %s8
  $region7: #{cnn_deconv_forward.5} parent=0 // loop_footer_branch
    %7 = sbr.rel target = $region3
  $region8: #{cnn_deconv_forward.5} parent=0 // loop_exit
    _

</llo_original>
